<compile_context>
chip_gen: v7x
topology: tpu7x:2x2x1
jax: 0.10.0
libtpu: 0.0.40
codegen_flags: <defaults>
</compile_context>

<pallas_src>
import jax
import jax.numpy as jnp
from jax import lax
from jax.experimental import pallas as pl
from jax.experimental.pallas import tpu as pltpu


def _make_kernel(need_skip, small, merged, Cmid, W, L):
    """Fused Residual2d body.  Activations are (C, L) blocks, L = Bn*H*W."""
    bf16, f32 = jnp.bfloat16, jnp.float32

    def mm(w, x):
        # (Co, Ci) @ (Ci, L) -> (Co, L), f32 accumulate.
        if small:
            # Tiny channel counts: unrolled f32 VPU FMAs beat a >95%-empty MXU
            # pass and keep full f32 accuracy.
            ci = w.shape[1]
            acc = w[:, 0:1] * x[0:1, :]
            for c in range(1, ci):
                acc = acc + w[:, c:c + 1] * x[c:c + 1, :]
            return acc
        return jnp.dot(w, x.astype(bf16), preferred_element_type=f32)

    def kernel(*refs):
        (x_ref, bn1_ref, w1_ref, bn23_ref, w2_ref, msk_ref, w3_ref,
         bias_ref) = refs[:8]
        pos = 8
        if need_skip:
            ws_ref = refs[pos]
            pos += 1
        o_ref = refs[pos]
        pos += 1
        tap_ref = refs[pos] if merged else None

        x = x_ref[...]                                        # (Cin, L) f32

        # ---- skip path: 1x1 conv (bias folded into bias_ref) or identity --
        residual = mm(ws_ref[...], x) if need_skip else x

        # ---- bn1 + relu + conv1 (1x1; conv1 bias folded into bn2 shift) ----
        t = jnp.maximum(x * bn1_ref[0] + bn1_ref[1], 0.0)
        t = mm(w1_ref[...], t)                                # (Cmid, L)

        # ---- bn2 + relu ----------------------------------------------------
        t = jnp.maximum(t * bn23_ref[0] + bn23_ref[1], 0.0)

        # ---- conv2 (3x3, SAME): lane rolls + host-precomputed masks --------
        taps = []
        for k in range(9):
            dy, dx = k // 3 - 1, k % 3 - 1
            d = dy * W + dx
            rolled = t if d == 0 else pltpu.roll(t, (-d) % L, axis=1)
            tap = rolled * msk_ref[k]                         # (Cmid, L)
            if merged:
                tap_ref[k * Cmid:(k + 1) * Cmid, :] = tap
            else:
                taps.append(tap)

        if merged:
            # Single MXU matmul with contraction K = 9*Cmid.
            t = jnp.dot(w2_ref[...], tap_ref[...].astype(bf16),
                        preferred_element_type=f32)
        elif small:
            # Unrolled f32 VPU FMAs over the 9*Cmid stacked input channels.
            w2 = w2_ref[...]
            acc = None
            for k in range(9):
                for c in range(Cmid):
                    j = k * Cmid + c
                    term = w2[:, j:j + 1] * taps[k][c:c + 1, :]
                    acc = term if acc is None else acc + term
            t = acc
        else:
            # MXU fallback (Cmid not 8-aligned): 9 dots, center tap initializes.
            w2 = w2_ref[...]
            acc = None
            for k in (4, 0, 1, 2, 3, 5, 6, 7, 8):
                term = jnp.dot(w2[:, k * Cmid:(k + 1) * Cmid],
                               taps[k].astype(bf16),
                               preferred_element_type=f32)
                acc = term if acc is None else acc + term
            t = acc

        # ---- bn3 (conv2 bias folded) + relu + conv3 + bias (+skip bias) ----
        t = jnp.maximum(t * bn23_ref[2] + bn23_ref[3], 0.0)
        t = mm(w3_ref[...], t) + bias_ref[...]

        o_ref[...] = (t + residual).astype(o_ref.dtype)

    return kernel


def residual2d(x_nchw, p, *, block_images=None, out_dtype=None):
    """Residual2d forward.  Accepts NCHW (like the PyTorch module), returns NCHW."""
    N, Cin, H, W = x_nchw.shape
    Cmid = p["w1"].shape[1]
    Cout = p["w3"].shape[1]
    HW = H * W
    need_skip = "ws" in p
    f32 = jnp.float32

    small = max(Cin, Cmid, Cout) <= 16          # VPU-FMA path for tiny channels
    merged = (not small) and (Cmid % 8 == 0)    # single (Cmid, 9*Cmid) conv2 dot
    wdt = f32 if small else jnp.bfloat16

    # ---- batching: fold Bn images into the lane axis ----------------------
    per_img = 4 * HW * (2 * (Cin + Cout) + 9 + 9 * Cmid + 4 * Cmid
                        + 2 * Cout + Cin)
    if block_images is None:
        bn_vmem = max(1, (10 << 20) // max(per_img, 1))
        bn_grid = max(1, N // 4)                # keep >= ~4 steps for 2-TC v7x
        Bn = max(1, min(bn_vmem, bn_grid, N))
    else:
        Bn = max(1, min(block_images, N))
    if (Bn * HW) % 128 != 0:                    # lane-dim divisibility fallback
        Bn = N
    n_blocks = -(-N // Bn)
    N_pad = n_blocks * Bn
    L = Bn * HW

    # ---- host-side parameter prep (trace-time, negligible) ----------------
    col = lambda v: v.reshape(-1, 1).astype(f32)
    bn1 = jnp.stack([col(p["s1"]), col(p["h1"])])                  # (2,Cin,1)
    bn23 = jnp.stack([col(p["s2"]), col(p["s2"] * p["b1"] + p["h2"]),
                      col(p["s3"]), col(p["s3"] * p["b2"] + p["h3"])])
    bias = col(p["b3"]) + (col(p["bs"]) if need_skip else 0.0)     # (Cout,1)
    w1t = p["w1"].T.astype(wdt)                                    # (Cmid,Cin)
    w2m = jnp.transpose(p["w2"], (3, 0, 1, 2)).reshape(Cmid, 9 * Cmid).astype(wdt)
    w3t = p["w3"].T.astype(wdt)                                    # (Cout,Cmid)

    # ---- boundary masks for the 9 taps (host-side, tiled over Bn images) --
    hh = jnp.arange(HW, dtype=jnp.int32) // W
    ww = jnp.arange(HW, dtype=jnp.int32) % W
    rows = []
    for k in range(9):
        dy, dx = k // 3 - 1, k % 3 - 1
        m = jnp.ones((HW,), f32)
        if dy == -1:
            m = m * (hh >= 1)
        if dy == 1:
            m = m * (hh <= H - 2)
        if dx == -1:
            m = m * (ww >= 1)
        if dx == 1:
            m = m * (ww <= W - 2)
        rows.append(m)
    mask = jnp.tile(jnp.stack(rows)[:, None, :], (1, 1, Bn))       # (9,1,L)

    # ---- relayout x to (Cin, N_pad*HW): batch folded into the lane axis ---
    x = x_nchw.reshape(N, Cin, HW).astype(f32)
    if N_pad != N:
        x = jnp.pad(x, ((0, N_pad - N), (0, 0), (0, 0)))
    x = jnp.transpose(x, (1, 0, 2)).reshape(Cin, N_pad * HW)

    args = [x, bn1, w1t, bn23, w2m, mask, w3t, bias]
    if need_skip:
        args.append(p["ws"].T.astype(wdt))                         # (Cout,Cin)

    def full_spec(shape):
        zeros = (0,) * len(shape)
        return pl.BlockSpec(shape, lambda b, _z=zeros: _z)

    in_specs = [pl.BlockSpec((Cin, L), lambda b: (0, b))]
    in_specs += [full_spec(a.shape) for a in args[1:]]
    out_spec = pl.BlockSpec((Cout, L), lambda b: (0, b))
    scratch = [pltpu.VMEM((9 * Cmid, L), f32)] if merged else []

    # Rough VMEM estimate; only raise the scoped limit when actually needed.
    vmem_est = (4 * L * 2 * (Cin + Cout) + 4 * L * 9
                + (4 * L * 9 * Cmid if merged else 0)
                + 4 * L * (4 * Cmid + 2 * Cout + Cin) + (2 << 20))
    vmem_limit = int(min(96 << 20, 2 * vmem_est)) if vmem_est > (12 << 20) else None

    out_dtype = x_nchw.dtype if out_dtype is None else out_dtype
    out_flat = pl.pallas_call(
        _make_kernel(need_skip, small, merged, Cmid, W, L),
        out_shape=jax.ShapeDtypeStruct((Cout, N_pad * HW), out_dtype),
        grid_spec=pltpu.PrefetchScalarGridSpec(
            num_scalar_prefetch=0,
            grid=(n_blocks,),
            in_specs=in_specs,
            out_specs=out_spec,
            scratch_shapes=scratch,
        ),
        compiler_params=pltpu.CompilerParams(
            dimension_semantics=("parallel",),
            vmem_limit_bytes=vmem_limit),
    )(*args)

    out = jnp.transpose(out_flat.reshape(Cout, N_pad, HW), (1, 0, 2))[:N]
    return out.reshape(N, Cout, H, W)


# ----------------------------- reference & test -----------------------------

def residual2d_ref(x_nhwc, p):
    hp = lax.Precision.HIGHEST
    relu = lambda v: jnp.maximum(v, 0.0)
    if "ws" in p:
        res = jnp.einsum("nhwc,co->nhwo", x_nhwc, p["ws"], precision=hp) + p["bs"]
    else:
        res = x_nhwc
    t = relu(x_nhwc * p["s1"] + p["h1"])
    t = jnp.einsum("nhwc,co->nhwo", t, p["w1"], precision=hp) + p["b1"]
    t = relu(t * p["s2"] + p["h2"])
    t = lax.conv_general_dilated(
        t, p["w2"], window_strides=(1, 1), padding="SAME",
        dimension_numbers=("NHWC", "HWIO", "NHWC"), precision=hp) + p["b2"]
    t = relu(t * p["s3"] + p["h3"])
    t = jnp.einsum("nhwc,co->nhwo", t, p["w3"], precision=hp) + p["b3"]
    return t + res


def make_params(key, inp_dim, out_dim):
    mid = out_dim // 2
    eps = 1e-5
    ks = jax.random.split(key, 24)
    it = iter(range(24))

    def bn(c):
        gamma = jax.random.uniform(ks[next(it)], (c,), minval=0.5, maxval=1.5)
        beta = 0.1 * jax.random.normal(ks[next(it)], (c,))
        mean = 0.1 * jax.random.normal(ks[next(it)], (c,))
        var = jax.random.uniform(ks[next(it)], (c,), minval=0.5, maxval=1.5)
        scale = gamma / jnp.sqrt(var + eps)
        shift = beta - mean * scale
        return scale.reshape(1, c), shift.reshape(1, c)

    s1, h1 = bn(inp_dim)
    s2, h2 = bn(mid)
    s3, h3 = bn(mid)
    w = lambda shp: 0.1 * jax.random.normal(ks[next(it)], shp)
    p = {
        "s1": s1, "h1": h1,
        "w1": w((inp_dim, mid)), "b1": w((1, mid)),
        "s2": s2, "h2": h2,
        "w2": w((3, 3, mid, mid)), "b2": w((1, mid)),    # HWIO
        "s3": s3, "h3": h3,
        "w3": w((mid, out_dim)), "b3": w((1, out_dim)),
    }
    if inp_dim != out_dim:            # need_skip=True -> 1x1 conv skip
        p["ws"] = w((inp_dim, out_dim))
        p["bs"] = w((1, out_dim))
    return {k: v.astype(jnp.float32) for k, v in p.items()}


if __name__ == "__main__":
    def run_case(key, N, Cin, Cout, H, W, tol):
        kx, kp = jax.random.split(key)
        x = jax.random.normal(kx, (N, Cin, H, W), dtype=jnp.float32)
        params = make_params(kp, Cin, Cout)
        out = jax.block_until_ready(residual2d(x, params))
        assert out.shape == (N, Cout, H, W), out.shape
        ref = jnp.transpose(
            residual2d_ref(jnp.transpose(x, (0, 2, 3, 1)), params), (0, 3, 1, 2))
        err = float(jnp.max(jnp.abs(out - ref)))
        assert jnp.allclose(out, ref, rtol=tol, atol=tol), (N, Cin, Cout, err)

    key = jax.random.PRNGKey(0)
    k1, k2, k3 = jax.random.split(key, 3)
    # 1) tiny channels -> f32 VPU-FMA path, 1x1-conv skip (main spec shape).
    run_case(k1, N=2, Cin=4, Cout=8, H=16, W=16, tol=2e-3)
    # 2) wider channels -> bf16 MXU path: merged (Cmid, 9*Cmid) conv2 matmul,
    #    Bn=2 images folded into the lane axis (grid=4).
    run_case(k2, N=8, Cin=32, Cout=64, H=16, W=16, tol=3e-2)
    # 3) identity residual (Cin == Cout), f32 VPU path.
    run_case(k3, N=4, Cin=8, Cout=8, H=16, W=16, tol=2e-3)
    print("KERNEL_OK")
</pallas_src>

<mosaic_0001>
module attributes {stable_mosaic.version = 11 : i64} {
  func.func @kernel(%arg0: i32, %arg1: memref<4x256xf32, #tpu.memory_space<vmem>>, %arg2: memref<2x4x1xf32, #tpu.memory_space<vmem>>, %arg3: memref<4x4xf32, #tpu.memory_space<vmem>>, %arg4: memref<4x4x1xf32, #tpu.memory_space<vmem>>, %arg5: memref<4x36xf32, #tpu.memory_space<vmem>>, %arg6: memref<9x1x256xf32, #tpu.memory_space<vmem>>, %arg7: memref<8x4xf32, #tpu.memory_space<vmem>>, %arg8: memref<8x1xf32, #tpu.memory_space<vmem>>, %arg9: memref<8x4xf32, #tpu.memory_space<vmem>>, %arg10: memref<8x256xf32, #tpu.memory_space<vmem>>) attributes {dimension_semantics = [#tpu.dimension_semantics<parallel>], iteration_bounds = array<i64: 2>, scalar_prefetch = 0 : i64, scratch_operands = 0 : i64, tpu.core_type = #tpu.core_type<tc>, window_params = [{transform_indices = @transform_0, window_bounds = array<i64: 4, 256>}, {pipeline_mode = #tpu.pipeline_mode<synchronous>, transform_indices = @transform_1, window_bounds = array<i64: 2, 4, 1>}, {pipeline_mode = #tpu.pipeline_mode<synchronous>, transform_indices = @transform_2, window_bounds = array<i64: 4, 4>}, {pipeline_mode = #tpu.pipeline_mode<synchronous>, transform_indices = @transform_3, window_bounds = array<i64: 4, 4, 1>}, {pipeline_mode = #tpu.pipeline_mode<synchronous>, transform_indices = @transform_4, window_bounds = array<i64: 4, 36>}, {pipeline_mode = #tpu.pipeline_mode<synchronous>, transform_indices = @transform_5, window_bounds = array<i64: 9, 1, 256>}, {pipeline_mode = #tpu.pipeline_mode<synchronous>, transform_indices = @transform_6, window_bounds = array<i64: 8, 4>}, {pipeline_mode = #tpu.pipeline_mode<synchronous>, transform_indices = @transform_7, window_bounds = array<i64: 8, 1>}, {pipeline_mode = #tpu.pipeline_mode<synchronous>, transform_indices = @transform_8, window_bounds = array<i64: 8, 4>}, {transform_indices = @transform_9, window_bounds = array<i64: 8, 256>}]} {
    %c0 = arith.constant 0 : index
    %c0_0 = arith.constant 0 : index
    %0 = vector.load %arg1[%c0, %c0_0] : memref<4x256xf32, #tpu.memory_space<vmem>>, vector<4x256xf32>
    %c0_1 = arith.constant 0 : index
    %c0_2 = arith.constant 0 : index
    %1 = vector.load %arg9[%c0_1, %c0_2] : memref<8x4xf32, #tpu.memory_space<vmem>>, vector<8x4xf32>
    %2 = vector.extract_strided_slice %1 {offsets = [0, 0], sizes = [8, 1], strides = [1, 1]} : vector<8x4xf32> to vector<8x1xf32>
    %3 = vector.extract_strided_slice %0 {offsets = [0, 0], sizes = [1, 256], strides = [1, 1]} : vector<4x256xf32> to vector<1x256xf32>
    %4 = vector.broadcast %2 : vector<8x1xf32> to vector<8x256xf32>
    %5 = vector.broadcast %3 : vector<1x256xf32> to vector<8x256xf32>
    %6 = arith.mulf %4, %5 : vector<8x256xf32>
    %7 = vector.extract_strided_slice %1 {offsets = [0, 1], sizes = [8, 1], strides = [1, 1]} : vector<8x4xf32> to vector<8x1xf32>
    %8 = vector.extract_strided_slice %0 {offsets = [1, 0], sizes = [1, 256], strides = [1, 1]} : vector<4x256xf32> to vector<1x256xf32>
    %9 = vector.broadcast %7 : vector<8x1xf32> to vector<8x256xf32>
    %10 = vector.broadcast %8 : vector<1x256xf32> to vector<8x256xf32>
    %11 = arith.mulf %9, %10 : vector<8x256xf32>
    %12 = arith.addf %6, %11 : vector<8x256xf32>
    %13 = vector.extract_strided_slice %1 {offsets = [0, 2], sizes = [8, 1], strides = [1, 1]} : vector<8x4xf32> to vector<8x1xf32>
    %14 = vector.extract_strided_slice %0 {offsets = [2, 0], sizes = [1, 256], strides = [1, 1]} : vector<4x256xf32> to vector<1x256xf32>
    %15 = vector.broadcast %13 : vector<8x1xf32> to vector<8x256xf32>
    %16 = vector.broadcast %14 : vector<1x256xf32> to vector<8x256xf32>
    %17 = arith.mulf %15, %16 : vector<8x256xf32>
    %18 = arith.addf %12, %17 : vector<8x256xf32>
    %19 = vector.extract_strided_slice %1 {offsets = [0, 3], sizes = [8, 1], strides = [1, 1]} : vector<8x4xf32> to vector<8x1xf32>
    %20 = vector.extract_strided_slice %0 {offsets = [3, 0], sizes = [1, 256], strides = [1, 1]} : vector<4x256xf32> to vector<1x256xf32>
    %21 = vector.broadcast %19 : vector<8x1xf32> to vector<8x256xf32>
    %22 = vector.broadcast %20 : vector<1x256xf32> to vector<8x256xf32>
    %23 = arith.mulf %21, %22 : vector<8x256xf32>
    %24 = arith.addf %18, %23 : vector<8x256xf32>
    %c0_3 = arith.constant 0 : index
    %c0_4 = arith.constant 0 : index
    %c0_5 = arith.constant 0 : index
    %25 = vector.load %arg2[%c0_3, %c0_4, %c0_5] : memref<2x4x1xf32, #tpu.memory_space<vmem>>, vector<1x4x1xf32>
    %26 = vector.shape_cast %25 : vector<1x4x1xf32> to vector<4x1xf32>
    %27 = vector.broadcast %26 : vector<4x1xf32> to vector<4x256xf32>
    %28 = arith.mulf %0, %27 : vector<4x256xf32>
    %c1 = arith.constant 1 : index
    %c0_6 = arith.constant 0 : index
    %c0_7 = arith.constant 0 : index
    %29 = vector.load %arg2[%c1, %c0_6, %c0_7] : memref<2x4x1xf32, #tpu.memory_space<vmem>>, vector<1x4x1xf32>
    %30 = vector.shape_cast %29 : vector<1x4x1xf32> to vector<4x1xf32>
    %31 = vector.broadcast %30 : vector<4x1xf32> to vector<4x256xf32>
    %32 = arith.addf %28, %31 : vector<4x256xf32>
    %cst = arith.constant 0.000000e+00 : f32
    %33 = vector.broadcast %cst : f32 to vector<4x256xf32>
    %34 = arith.maximumf %32, %33 : vector<4x256xf32>
    %c0_8 = arith.constant 0 : index
    %c0_9 = arith.constant 0 : index
    %35 = vector.load %arg3[%c0_8, %c0_9] : memref<4x4xf32, #tpu.memory_space<vmem>>, vector<4x4xf32>
    %36 = vector.extract_strided_slice %35 {offsets = [0, 0], sizes = [4, 1], strides = [1, 1]} : vector<4x4xf32> to vector<4x1xf32>
    %37 = vector.extract_strided_slice %34 {offsets = [0, 0], sizes = [1, 256], strides = [1, 1]} : vector<4x256xf32> to vector<1x256xf32>
    %38 = vector.broadcast %36 : vector<4x1xf32> to vector<4x256xf32>
    %39 = vector.broadcast %37 : vector<1x256xf32> to vector<4x256xf32>
    %40 = arith.mulf %38, %39 : vector<4x256xf32>
    %41 = vector.extract_strided_slice %35 {offsets = [0, 1], sizes = [4, 1], strides = [1, 1]} : vector<4x4xf32> to vector<4x1xf32>
    %42 = vector.extract_strided_slice %34 {offsets = [1, 0], sizes = [1, 256], strides = [1, 1]} : vector<4x256xf32> to vector<1x256xf32>
    %43 = vector.broadcast %41 : vector<4x1xf32> to vector<4x256xf32>
    %44 = vector.broadcast %42 : vector<1x256xf32> to vector<4x256xf32>
    %45 = arith.mulf %43, %44 : vector<4x256xf32>
    %46 = arith.addf %40, %45 : vector<4x256xf32>
    %47 = vector.extract_strided_slice %35 {offsets = [0, 2], sizes = [4, 1], strides = [1, 1]} : vector<4x4xf32> to vector<4x1xf32>
    %48 = vector.extract_strided_slice %34 {offsets = [2, 0], sizes = [1, 256], strides = [1, 1]} : vector<4x256xf32> to vector<1x256xf32>
    %49 = vector.broadcast %47 : vector<4x1xf32> to vector<4x256xf32>
    %50 = vector.broadcast %48 : vector<1x256xf32> to vector<4x256xf32>
    %51 = arith.mulf %49, %50 : vector<4x256xf32>
    %52 = arith.addf %46, %51 : vector<4x256xf32>
    %53 = vector.extract_strided_slice %35 {offsets = [0, 3], sizes = [4, 1], strides = [1, 1]} : vector<4x4xf32> to vector<4x1xf32>
    %54 = vector.extract_strided_slice %34 {offsets = [3, 0], sizes = [1, 256], strides = [1, 1]} : vector<4x256xf32> to vector<1x256xf32>
    %55 = vector.broadcast %53 : vector<4x1xf32> to vector<4x256xf32>
    %56 = vector.broadcast %54 : vector<1x256xf32> to vector<4x256xf32>
    %57 = arith.mulf %55, %56 : vector<4x256xf32>
    %58 = arith.addf %52, %57 : vector<4x256xf32>
    %c0_10 = arith.constant 0 : index
    %c0_11 = arith.constant 0 : index
    %c0_12 = arith.constant 0 : index
    %59 = vector.load %arg4[%c0_10, %c0_11, %c0_12] : memref<4x4x1xf32, #tpu.memory_space<vmem>>, vector<1x4x1xf32>
    %60 = vector.shape_cast %59 : vector<1x4x1xf32> to vector<4x1xf32>
    %61 = vector.broadcast %60 : vector<4x1xf32> to vector<4x256xf32>
    %62 = arith.mulf %58, %61 : vector<4x256xf32>
    %c1_13 = arith.constant 1 : index
    %c0_14 = arith.constant 0 : index
    %c0_15 = arith.constant 0 : index
    %63 = vector.load %arg4[%c1_13, %c0_14, %c0_15] : memref<4x4x1xf32, #tpu.memory_space<vmem>>, vector<1x4x1xf32>
    %64 = vector.shape_cast %63 : vector<1x4x1xf32> to vector<4x1xf32>
    %65 = vector.broadcast %64 : vector<4x1xf32> to vector<4x256xf32>
    %66 = arith.addf %62, %65 : vector<4x256xf32>
    %cst_16 = arith.constant 0.000000e+00 : f32
    %67 = vector.broadcast %cst_16 : f32 to vector<4x256xf32>
    %68 = arith.maximumf %66, %67 : vector<4x256xf32>
    %c17_i32 = arith.constant 17 : i32
    %69 = tpu.dynamic_rotate %68 by %c17_i32 dim 1 : vector<4x256xf32>, i32 -> vector<4x256xf32>
    %c0_17 = arith.constant 0 : index
    %c0_18 = arith.constant 0 : index
    %c0_19 = arith.constant 0 : index
    %70 = vector.load %arg6[%c0_17, %c0_18, %c0_19] : memref<9x1x256xf32, #tpu.memory_space<vmem>>, vector<1x1x256xf32>
    %71 = vector.shape_cast %70 : vector<1x1x256xf32> to vector<1x256xf32>
    %72 = vector.broadcast %71 : vector<1x256xf32> to vector<4x256xf32>
    %73 = arith.mulf %69, %72 : vector<4x256xf32>
    %c16_i32 = arith.constant 16 : i32
    %74 = tpu.dynamic_rotate %68 by %c16_i32 dim 1 : vector<4x256xf32>, i32 -> vector<4x256xf32>
    %c1_20 = arith.constant 1 : index
    %c0_21 = arith.constant 0 : index
    %c0_22 = arith.constant 0 : index
    %75 = vector.load %arg6[%c1_20, %c0_21, %c0_22] : memref<9x1x256xf32, #tpu.memory_space<vmem>>, vector<1x1x256xf32>
    %76 = vector.shape_cast %75 : vector<1x1x256xf32> to vector<1x256xf32>
    %77 = vector.broadcast %76 : vector<1x256xf32> to vector<4x256xf32>
    %78 = arith.mulf %74, %77 : vector<4x256xf32>
    %c15_i32 = arith.constant 15 : i32
    %79 = tpu.dynamic_rotate %68 by %c15_i32 dim 1 : vector<4x256xf32>, i32 -> vector<4x256xf32>
    %c2 = arith.constant 2 : index
    %c0_23 = arith.constant 0 : index
    %c0_24 = arith.constant 0 : index
    %80 = vector.load %arg6[%c2, %c0_23, %c0_24] : memref<9x1x256xf32, #tpu.memory_space<vmem>>, vector<1x1x256xf32>
    %81 = vector.shape_cast %80 : vector<1x1x256xf32> to vector<1x256xf32>
    %82 = vector.broadcast %81 : vector<1x256xf32> to vector<4x256xf32>
    %83 = arith.mulf %79, %82 : vector<4x256xf32>
    %c1_i32 = arith.constant 1 : i32
    %84 = tpu.dynamic_rotate %68 by %c1_i32 dim 1 : vector<4x256xf32>, i32 -> vector<4x256xf32>
    %c3 = arith.constant 3 : index
    %c0_25 = arith.constant 0 : index
    %c0_26 = arith.constant 0 : index
    %85 = vector.load %arg6[%c3, %c0_25, %c0_26] : memref<9x1x256xf32, #tpu.memory_space<vmem>>, vector<1x1x256xf32>
    %86 = vector.shape_cast %85 : vector<1x1x256xf32> to vector<1x256xf32>
    %87 = vector.broadcast %86 : vector<1x256xf32> to vector<4x256xf32>
    %88 = arith.mulf %84, %87 : vector<4x256xf32>
    %c4 = arith.constant 4 : index
    %c0_27 = arith.constant 0 : index
    %c0_28 = arith.constant 0 : index
    %89 = vector.load %arg6[%c4, %c0_27, %c0_28] : memref<9x1x256xf32, #tpu.memory_space<vmem>>, vector<1x1x256xf32>
    %90 = vector.shape_cast %89 : vector<1x1x256xf32> to vector<1x256xf32>
    %91 = vector.broadcast %90 : vector<1x256xf32> to vector<4x256xf32>
    %92 = arith.mulf %68, %91 : vector<4x256xf32>
    %c255_i32 = arith.constant 255 : i32
    %93 = tpu.dynamic_rotate %68 by %c255_i32 dim 1 : vector<4x256xf32>, i32 -> vector<4x256xf32>
    %c5 = arith.constant 5 : index
    %c0_29 = arith.constant 0 : index
    %c0_30 = arith.constant 0 : index
    %94 = vector.load %arg6[%c5, %c0_29, %c0_30] : memref<9x1x256xf32, #tpu.memory_space<vmem>>, vector<1x1x256xf32>
    %95 = vector.shape_cast %94 : vector<1x1x256xf32> to vector<1x256xf32>
    %96 = vector.broadcast %95 : vector<1x256xf32> to vector<4x256xf32>
    %97 = arith.mulf %93, %96 : vector<4x256xf32>
    %c241_i32 = arith.constant 241 : i32
    %98 = tpu.dynamic_rotate %68 by %c241_i32 dim 1 : vector<4x256xf32>, i32 -> vector<4x256xf32>
    %c6 = arith.constant 6 : index
    %c0_31 = arith.constant 0 : index
    %c0_32 = arith.constant 0 : index
    %99 = vector.load %arg6[%c6, %c0_31, %c0_32] : memref<9x1x256xf32, #tpu.memory_space<vmem>>, vector<1x1x256xf32>
    %100 = vector.shape_cast %99 : vector<1x1x256xf32> to vector<1x256xf32>
    %101 = vector.broadcast %100 : vector<1x256xf32> to vector<4x256xf32>
    %102 = arith.mulf %98, %101 : vector<4x256xf32>
    %c240_i32 = arith.constant 240 : i32
    %103 = tpu.dynamic_rotate %68 by %c240_i32 dim 1 : vector<4x256xf32>, i32 -> vector<4x256xf32>
    %c7 = arith.constant 7 : index
    %c0_33 = arith.constant 0 : index
    %c0_34 = arith.constant 0 : index
    %104 = vector.load %arg6[%c7, %c0_33, %c0_34] : memref<9x1x256xf32, #tpu.memory_space<vmem>>, vector<1x1x256xf32>
    %105 = vector.shape_cast %104 : vector<1x1x256xf32> to vector<1x256xf32>
    %106 = vector.broadcast %105 : vector<1x256xf32> to vector<4x256xf32>
    %107 = arith.mulf %103, %106 : vector<4x256xf32>
    %c239_i32 = arith.constant 239 : i32
    %108 = tpu.dynamic_rotate %68 by %c239_i32 dim 1 : vector<4x256xf32>, i32 -> vector<4x256xf32>
    %c8 = arith.constant 8 : index
    %c0_35 = arith.constant 0 : index
    %c0_36 = arith.constant 0 : index
    %109 = vector.load %arg6[%c8, %c0_35, %c0_36] : memref<9x1x256xf32, #tpu.memory_space<vmem>>, vector<1x1x256xf32>
    %110 = vector.shape_cast %109 : vector<1x1x256xf32> to vector<1x256xf32>
    %111 = vector.broadcast %110 : vector<1x256xf32> to vector<4x256xf32>
    %112 = arith.mulf %108, %111 : vector<4x256xf32>
    %c0_37 = arith.constant 0 : index
    %c0_38 = arith.constant 0 : index
    %113 = vector.load %arg5[%c0_37, %c0_38] : memref<4x36xf32, #tpu.memory_space<vmem>>, vector<4x36xf32>
    %114 = vector.extract_strided_slice %113 {offsets = [0, 0], sizes = [4, 1], strides = [1, 1]} : vector<4x36xf32> to vector<4x1xf32>
    %115 = vector.extract_strided_slice %73 {offsets = [0, 0], sizes = [1, 256], strides = [1, 1]} : vector<4x256xf32> to vector<1x256xf32>
    %116 = vector.broadcast %114 : vector<4x1xf32> to vector<4x256xf32>
    %117 = vector.broadcast %115 : vector<1x256xf32> to vector<4x256xf32>
    %118 = arith.mulf %116, %117 : vector<4x256xf32>
    %119 = vector.extract_strided_slice %113 {offsets = [0, 1], sizes = [4, 1], strides = [1, 1]} : vector<4x36xf32> to vector<4x1xf32>
    %120 = vector.extract_strided_slice %73 {offsets = [1, 0], sizes = [1, 256], strides = [1, 1]} : vector<4x256xf32> to vector<1x256xf32>
    %121 = vector.broadcast %119 : vector<4x1xf32> to vector<4x256xf32>
    %122 = vector.broadcast %120 : vector<1x256xf32> to vector<4x256xf32>
    %123 = arith.mulf %121, %122 : vector<4x256xf32>
    %124 = arith.addf %118, %123 : vector<4x256xf32>
    %125 = vector.extract_strided_slice %113 {offsets = [0, 2], sizes = [4, 1], strides = [1, 1]} : vector<4x36xf32> to vector<4x1xf32>
    %126 = vector.extract_strided_slice %73 {offsets = [2, 0], sizes = [1, 256], strides = [1, 1]} : vector<4x256xf32> to vector<1x256xf32>
    %127 = vector.broadcast %125 : vector<4x1xf32> to vector<4x256xf32>
    %128 = vector.broadcast %126 : vector<1x256xf32> to vector<4x256xf32>
    %129 = arith.mulf %127, %128 : vector<4x256xf32>
    %130 = arith.addf %124, %129 : vector<4x256xf32>
    %131 = vector.extract_strided_slice %113 {offsets = [0, 3], sizes = [4, 1], strides = [1, 1]} : vector<4x36xf32> to vector<4x1xf32>
    %132 = vector.extract_strided_slice %73 {offsets = [3, 0], sizes = [1, 256], strides = [1, 1]} : vector<4x256xf32> to vector<1x256xf32>
    %133 = vector.broadcast %131 : vector<4x1xf32> to vector<4x256xf32>
    %134 = vector.broadcast %132 : vector<1x256xf32> to vector<4x256xf32>
    %135 = arith.mulf %133, %134 : vector<4x256xf32>
    %136 = arith.addf %130, %135 : vector<4x256xf32>
    %137 = vector.extract_strided_slice %113 {offsets = [0, 4], sizes = [4, 1], strides = [1, 1]} : vector<4x36xf32> to vector<4x1xf32>
    %138 = vector.extract_strided_slice %78 {offsets = [0, 0], sizes = [1, 256], strides = [1, 1]} : vector<4x256xf32> to vector<1x256xf32>
    %139 = vector.broadcast %137 : vector<4x1xf32> to vector<4x256xf32>
    %140 = vector.broadcast %138 : vector<1x256xf32> to vector<4x256xf32>
    %141 = arith.mulf %139, %140 : vector<4x256xf32>
    %142 = arith.addf %136, %141 : vector<4x256xf32>
    %143 = vector.extract_strided_slice %113 {offsets = [0, 5], sizes = [4, 1], strides = [1, 1]} : vector<4x36xf32> to vector<4x1xf32>
    %144 = vector.extract_strided_slice %78 {offsets = [1, 0], sizes = [1, 256], strides = [1, 1]} : vector<4x256xf32> to vector<1x256xf32>
    %145 = vector.broadcast %143 : vector<4x1xf32> to vector<4x256xf32>
    %146 = vector.broadcast %144 : vector<1x256xf32> to vector<4x256xf32>
    %147 = arith.mulf %145, %146 : vector<4x256xf32>
    %148 = arith.addf %142, %147 : vector<4x256xf32>
    %149 = vector.extract_strided_slice %113 {offsets = [0, 6], sizes = [4, 1], strides = [1, 1]} : vector<4x36xf32> to vector<4x1xf32>
    %150 = vector.extract_strided_slice %78 {offsets = [2, 0], sizes = [1, 256], strides = [1, 1]} : vector<4x256xf32> to vector<1x256xf32>
    %151 = vector.broadcast %149 : vector<4x1xf32> to vector<4x256xf32>
    %152 = vector.broadcast %150 : vector<1x256xf32> to vector<4x256xf32>
    %153 = arith.mulf %151, %152 : vector<4x256xf32>
    %154 = arith.addf %148, %153 : vector<4x256xf32>
    %155 = vector.extract_strided_slice %113 {offsets = [0, 7], sizes = [4, 1], strides = [1, 1]} : vector<4x36xf32> to vector<4x1xf32>
    %156 = vector.extract_strided_slice %78 {offsets = [3, 0], sizes = [1, 256], strides = [1, 1]} : vector<4x256xf32> to vector<1x256xf32>
    %157 = vector.broadcast %155 : vector<4x1xf32> to vector<4x256xf32>
    %158 = vector.broadcast %156 : vector<1x256xf32> to vector<4x256xf32>
    %159 = arith.mulf %157, %158 : vector<4x256xf32>
    %160 = arith.addf %154, %159 : vector<4x256xf32>
    %161 = vector.extract_strided_slice %113 {offsets = [0, 8], sizes = [4, 1], strides = [1, 1]} : vector<4x36xf32> to vector<4x1xf32>
    %162 = vector.extract_strided_slice %83 {offsets = [0, 0], sizes = [1, 256], strides = [1, 1]} : vector<4x256xf32> to vector<1x256xf32>
    %163 = vector.broadcast %161 : vector<4x1xf32> to vector<4x256xf32>
    %164 = vector.broadcast %162 : vector<1x256xf32> to vector<4x256xf32>
    %165 = arith.mulf %163, %164 : vector<4x256xf32>
    %166 = arith.addf %160, %165 : vector<4x256xf32>
    %167 = vector.extract_strided_slice %113 {offsets = [0, 9], sizes = [4, 1], strides = [1, 1]} : vector<4x36xf32> to vector<4x1xf32>
    %168 = vector.extract_strided_slice %83 {offsets = [1, 0], sizes = [1, 256], strides = [1, 1]} : vector<4x256xf32> to vector<1x256xf32>
    %169 = vector.broadcast %167 : vector<4x1xf32> to vector<4x256xf32>
    %170 = vector.broadcast %168 : vector<1x256xf32> to vector<4x256xf32>
    %171 = arith.mulf %169, %170 : vector<4x256xf32>
    %172 = arith.addf %166, %171 : vector<4x256xf32>
    %173 = vector.extract_strided_slice %113 {offsets = [0, 10], sizes = [4, 1], strides = [1, 1]} : vector<4x36xf32> to vector<4x1xf32>
    %174 = vector.extract_strided_slice %83 {offsets = [2, 0], sizes = [1, 256], strides = [1, 1]} : vector<4x256xf32> to vector<1x256xf32>
    %175 = vector.broadcast %173 : vector<4x1xf32> to vector<4x256xf32>
    %176 = vector.broadcast %174 : vector<1x256xf32> to vector<4x256xf32>
    %177 = arith.mulf %175, %176 : vector<4x256xf32>
    %178 = arith.addf %172, %177 : vector<4x256xf32>
    %179 = vector.extract_strided_slice %113 {offsets = [0, 11], sizes = [4, 1], strides = [1, 1]} : vector<4x36xf32> to vector<4x1xf32>
    %180 = vector.extract_strided_slice %83 {offsets = [3, 0], sizes = [1, 256], strides = [1, 1]} : vector<4x256xf32> to vector<1x256xf32>
    %181 = vector.broadcast %179 : vector<4x1xf32> to vector<4x256xf32>
    %182 = vector.broadcast %180 : vector<1x256xf32> to vector<4x256xf32>
    %183 = arith.mulf %181, %182 : vector<4x256xf32>
    %184 = arith.addf %178, %183 : vector<4x256xf32>
    %185 = vector.extract_strided_slice %113 {offsets = [0, 12], sizes = [4, 1], strides = [1, 1]} : vector<4x36xf32> to vector<4x1xf32>
    %186 = vector.extract_strided_slice %88 {offsets = [0, 0], sizes = [1, 256], strides = [1, 1]} : vector<4x256xf32> to vector<1x256xf32>
    %187 = vector.broadcast %185 : vector<4x1xf32> to vector<4x256xf32>
    %188 = vector.broadcast %186 : vector<1x256xf32> to vector<4x256xf32>
    %189 = arith.mulf %187, %188 : vector<4x256xf32>
    %190 = arith.addf %184, %189 : vector<4x256xf32>
    %191 = vector.extract_strided_slice %113 {offsets = [0, 13], sizes = [4, 1], strides = [1, 1]} : vector<4x36xf32> to vector<4x1xf32>
    %192 = vector.extract_strided_slice %88 {offsets = [1, 0], sizes = [1, 256], strides = [1, 1]} : vector<4x256xf32> to vector<1x256xf32>
    %193 = vector.broadcast %191 : vector<4x1xf32> to vector<4x256xf32>
    %194 = vector.broadcast %192 : vector<1x256xf32> to vector<4x256xf32>
    %195 = arith.mulf %193, %194 : vector<4x256xf32>
    %196 = arith.addf %190, %195 : vector<4x256xf32>
    %197 = vector.extract_strided_slice %113 {offsets = [0, 14], sizes = [4, 1], strides = [1, 1]} : vector<4x36xf32> to vector<4x1xf32>
    %198 = vector.extract_strided_slice %88 {offsets = [2, 0], sizes = [1, 256], strides = [1, 1]} : vector<4x256xf32> to vector<1x256xf32>
    %199 = vector.broadcast %197 : vector<4x1xf32> to vector<4x256xf32>
    %200 = vector.broadcast %198 : vector<1x256xf32> to vector<4x256xf32>
    %201 = arith.mulf %199, %200 : vector<4x256xf32>
    %202 = arith.addf %196, %201 : vector<4x256xf32>
    %203 = vector.extract_strided_slice %113 {offsets = [0, 15], sizes = [4, 1], strides = [1, 1]} : vector<4x36xf32> to vector<4x1xf32>
    %204 = vector.extract_strided_slice %88 {offsets = [3, 0], sizes = [1, 256], strides = [1, 1]} : vector<4x256xf32> to vector<1x256xf32>
    %205 = vector.broadcast %203 : vector<4x1xf32> to vector<4x256xf32>
    %206 = vector.broadcast %204 : vector<1x256xf32> to vector<4x256xf32>
    %207 = arith.mulf %205, %206 : vector<4x256xf32>
    %208 = arith.addf %202, %207 : vector<4x256xf32>
    %209 = vector.extract_strided_slice %113 {offsets = [0, 16], sizes = [4, 1], strides = [1, 1]} : vector<4x36xf32> to vector<4x1xf32>
    %210 = vector.extract_strided_slice %92 {offsets = [0, 0], sizes = [1, 256], strides = [1, 1]} : vector<4x256xf32> to vector<1x256xf32>
    %211 = vector.broadcast %209 : vector<4x1xf32> to vector<4x256xf32>
    %212 = vector.broadcast %210 : vector<1x256xf32> to vector<4x256xf32>
    %213 = arith.mulf %211, %212 : vector<4x256xf32>
    %214 = arith.addf %208, %213 : vector<4x256xf32>
    %215 = vector.extract_strided_slice %113 {offsets = [0, 17], sizes = [4, 1], strides = [1, 1]} : vector<4x36xf32> to vector<4x1xf32>
    %216 = vector.extract_strided_slice %92 {offsets = [1, 0], sizes = [1, 256], strides = [1, 1]} : vector<4x256xf32> to vector<1x256xf32>
    %217 = vector.broadcast %215 : vector<4x1xf32> to vector<4x256xf32>
    %218 = vector.broadcast %216 : vector<1x256xf32> to vector<4x256xf32>
    %219 = arith.mulf %217, %218 : vector<4x256xf32>
    %220 = arith.addf %214, %219 : vector<4x256xf32>
    %221 = vector.extract_strided_slice %113 {offsets = [0, 18], sizes = [4, 1], strides = [1, 1]} : vector<4x36xf32> to vector<4x1xf32>
    %222 = vector.extract_strided_slice %92 {offsets = [2, 0], sizes = [1, 256], strides = [1, 1]} : vector<4x256xf32> to vector<1x256xf32>
    %223 = vector.broadcast %221 : vector<4x1xf32> to vector<4x256xf32>
    %224 = vector.broadcast %222 : vector<1x256xf32> to vector<4x256xf32>
    %225 = arith.mulf %223, %224 : vector<4x256xf32>
    %226 = arith.addf %220, %225 : vector<4x256xf32>
    %227 = vector.extract_strided_slice %113 {offsets = [0, 19], sizes = [4, 1], strides = [1, 1]} : vector<4x36xf32> to vector<4x1xf32>
    %228 = vector.extract_strided_slice %92 {offsets = [3, 0], sizes = [1, 256], strides = [1, 1]} : vector<4x256xf32> to vector<1x256xf32>
    %229 = vector.broadcast %227 : vector<4x1xf32> to vector<4x256xf32>
    %230 = vector.broadcast %228 : vector<1x256xf32> to vector<4x256xf32>
    %231 = arith.mulf %229, %230 : vector<4x256xf32>
    %232 = arith.addf %226, %231 : vector<4x256xf32>
    %233 = vector.extract_strided_slice %113 {offsets = [0, 20], sizes = [4, 1], strides = [1, 1]} : vector<4x36xf32> to vector<4x1xf32>
    %234 = vector.extract_strided_slice %97 {offsets = [0, 0], sizes = [1, 256], strides = [1, 1]} : vector<4x256xf32> to vector<1x256xf32>
    %235 = vector.broadcast %233 : vector<4x1xf32> to vector<4x256xf32>
    %236 = vector.broadcast %234 : vector<1x256xf32> to vector<4x256xf32>
    %237 = arith.mulf %235, %236 : vector<4x256xf32>
    %238 = arith.addf %232, %237 : vector<4x256xf32>
    %239 = vector.extract_strided_slice %113 {offsets = [0, 21], sizes = [4, 1], strides = [1, 1]} : vector<4x36xf32> to vector<4x1xf32>
    %240 = vector.extract_strided_slice %97 {offsets = [1, 0], sizes = [1, 256], strides = [1, 1]} : vector<4x256xf32> to vector<1x256xf32>
    %241 = vector.broadcast %239 : vector<4x1xf32> to vector<4x256xf32>
    %242 = vector.broadcast %240 : vector<1x256xf32> to vector<4x256xf32>
    %243 = arith.mulf %241, %242 : vector<4x256xf32>
    %244 = arith.addf %238, %243 : vector<4x256xf32>
    %245 = vector.extract_strided_slice %113 {offsets = [0, 22], sizes = [4, 1], strides = [1, 1]} : vector<4x36xf32> to vector<4x1xf32>
    %246 = vector.extract_strided_slice %97 {offsets = [2, 0], sizes = [1, 256], strides = [1, 1]} : vector<4x256xf32> to vector<1x256xf32>
    %247 = vector.broadcast %245 : vector<4x1xf32> to vector<4x256xf32>
    %248 = vector.broadcast %246 : vector<1x256xf32> to vector<4x256xf32>
    %249 = arith.mulf %247, %248 : vector<4x256xf32>
    %250 = arith.addf %244, %249 : vector<4x256xf32>
    %251 = vector.extract_strided_slice %113 {offsets = [0, 23], sizes = [4, 1], strides = [1, 1]} : vector<4x36xf32> to vector<4x1xf32>
    %252 = vector.extract_strided_slice %97 {offsets = [3, 0], sizes = [1, 256], strides = [1, 1]} : vector<4x256xf32> to vector<1x256xf32>
    %253 = vector.broadcast %251 : vector<4x1xf32> to vector<4x256xf32>
    %254 = vector.broadcast %252 : vector<1x256xf32> to vector<4x256xf32>
    %255 = arith.mulf %253, %254 : vector<4x256xf32>
    %256 = arith.addf %250, %255 : vector<4x256xf32>
    %257 = vector.extract_strided_slice %113 {offsets = [0, 24], sizes = [4, 1], strides = [1, 1]} : vector<4x36xf32> to vector<4x1xf32>
    %258 = vector.extract_strided_slice %102 {offsets = [0, 0], sizes = [1, 256], strides = [1, 1]} : vector<4x256xf32> to vector<1x256xf32>
    %259 = vector.broadcast %257 : vector<4x1xf32> to vector<4x256xf32>
    %260 = vector.broadcast %258 : vector<1x256xf32> to vector<4x256xf32>
    %261 = arith.mulf %259, %260 : vector<4x256xf32>
    %262 = arith.addf %256, %261 : vector<4x256xf32>
    %263 = vector.extract_strided_slice %113 {offsets = [0, 25], sizes = [4, 1], strides = [1, 1]} : vector<4x36xf32> to vector<4x1xf32>
    %264 = vector.extract_strided_slice %102 {offsets = [1, 0], sizes = [1, 256], strides = [1, 1]} : vector<4x256xf32> to vector<1x256xf32>
    %265 = vector.broadcast %263 : vector<4x1xf32> to vector<4x256xf32>
    %266 = vector.broadcast %264 : vector<1x256xf32> to vector<4x256xf32>
    %267 = arith.mulf %265, %266 : vector<4x256xf32>
    %268 = arith.addf %262, %267 : vector<4x256xf32>
    %269 = vector.extract_strided_slice %113 {offsets = [0, 26], sizes = [4, 1], strides = [1, 1]} : vector<4x36xf32> to vector<4x1xf32>
    %270 = vector.extract_strided_slice %102 {offsets = [2, 0], sizes = [1, 256], strides = [1, 1]} : vector<4x256xf32> to vector<1x256xf32>
    %271 = vector.broadcast %269 : vector<4x1xf32> to vector<4x256xf32>
    %272 = vector.broadcast %270 : vector<1x256xf32> to vector<4x256xf32>
    %273 = arith.mulf %271, %272 : vector<4x256xf32>
    %274 = arith.addf %268, %273 : vector<4x256xf32>
    %275 = vector.extract_strided_slice %113 {offsets = [0, 27], sizes = [4, 1], strides = [1, 1]} : vector<4x36xf32> to vector<4x1xf32>
    %276 = vector.extract_strided_slice %102 {offsets = [3, 0], sizes = [1, 256], strides = [1, 1]} : vector<4x256xf32> to vector<1x256xf32>
    %277 = vector.broadcast %275 : vector<4x1xf32> to vector<4x256xf32>
    %278 = vector.broadcast %276 : vector<1x256xf32> to vector<4x256xf32>
    %279 = arith.mulf %277, %278 : vector<4x256xf32>
    %280 = arith.addf %274, %279 : vector<4x256xf32>
    %281 = vector.extract_strided_slice %113 {offsets = [0, 28], sizes = [4, 1], strides = [1, 1]} : vector<4x36xf32> to vector<4x1xf32>
    %282 = vector.extract_strided_slice %107 {offsets = [0, 0], sizes = [1, 256], strides = [1, 1]} : vector<4x256xf32> to vector<1x256xf32>
    %283 = vector.broadcast %281 : vector<4x1xf32> to vector<4x256xf32>
    %284 = vector.broadcast %282 : vector<1x256xf32> to vector<4x256xf32>
    %285 = arith.mulf %283, %284 : vector<4x256xf32>
    %286 = arith.addf %280, %285 : vector<4x256xf32>
    %287 = vector.extract_strided_slice %113 {offsets = [0, 29], sizes = [4, 1], strides = [1, 1]} : vector<4x36xf32> to vector<4x1xf32>
    %288 = vector.extract_strided_slice %107 {offsets = [1, 0], sizes = [1, 256], strides = [1, 1]} : vector<4x256xf32> to vector<1x256xf32>
    %289 = vector.broadcast %287 : vector<4x1xf32> to vector<4x256xf32>
    %290 = vector.broadcast %288 : vector<1x256xf32> to vector<4x256xf32>
    %291 = arith.mulf %289, %290 : vector<4x256xf32>
    %292 = arith.addf %286, %291 : vector<4x256xf32>
    %293 = vector.extract_strided_slice %113 {offsets = [0, 30], sizes = [4, 1], strides = [1, 1]} : vector<4x36xf32> to vector<4x1xf32>
    %294 = vector.extract_strided_slice %107 {offsets = [2, 0], sizes = [1, 256], strides = [1, 1]} : vector<4x256xf32> to vector<1x256xf32>
    %295 = vector.broadcast %293 : vector<4x1xf32> to vector<4x256xf32>
    %296 = vector.broadcast %294 : vector<1x256xf32> to vector<4x256xf32>
    %297 = arith.mulf %295, %296 : vector<4x256xf32>
    %298 = arith.addf %292, %297 : vector<4x256xf32>
    %299 = vector.extract_strided_slice %113 {offsets = [0, 31], sizes = [4, 1], strides = [1, 1]} : vector<4x36xf32> to vector<4x1xf32>
    %300 = vector.extract_strided_slice %107 {offsets = [3, 0], sizes = [1, 256], strides = [1, 1]} : vector<4x256xf32> to vector<1x256xf32>
    %301 = vector.broadcast %299 : vector<4x1xf32> to vector<4x256xf32>
    %302 = vector.broadcast %300 : vector<1x256xf32> to vector<4x256xf32>
    %303 = arith.mulf %301, %302 : vector<4x256xf32>
    %304 = arith.addf %298, %303 : vector<4x256xf32>
    %305 = vector.extract_strided_slice %113 {offsets = [0, 32], sizes = [4, 1], strides = [1, 1]} : vector<4x36xf32> to vector<4x1xf32>
    %306 = vector.extract_strided_slice %112 {offsets = [0, 0], sizes = [1, 256], strides = [1, 1]} : vector<4x256xf32> to vector<1x256xf32>
    %307 = vector.broadcast %305 : vector<4x1xf32> to vector<4x256xf32>
    %308 = vector.broadcast %306 : vector<1x256xf32> to vector<4x256xf32>
    %309 = arith.mulf %307, %308 : vector<4x256xf32>
    %310 = arith.addf %304, %309 : vector<4x256xf32>
    %311 = vector.extract_strided_slice %113 {offsets = [0, 33], sizes = [4, 1], strides = [1, 1]} : vector<4x36xf32> to vector<4x1xf32>
    %312 = vector.extract_strided_slice %112 {offsets = [1, 0], sizes = [1, 256], strides = [1, 1]} : vector<4x256xf32> to vector<1x256xf32>
    %313 = vector.broadcast %311 : vector<4x1xf32> to vector<4x256xf32>
    %314 = vector.broadcast %312 : vector<1x256xf32> to vector<4x256xf32>
    %315 = arith.mulf %313, %314 : vector<4x256xf32>
    %316 = arith.addf %310, %315 : vector<4x256xf32>
    %317 = vector.extract_strided_slice %113 {offsets = [0, 34], sizes = [4, 1], strides = [1, 1]} : vector<4x36xf32> to vector<4x1xf32>
    %318 = vector.extract_strided_slice %112 {offsets = [2, 0], sizes = [1, 256], strides = [1, 1]} : vector<4x256xf32> to vector<1x256xf32>
    %319 = vector.broadcast %317 : vector<4x1xf32> to vector<4x256xf32>
    %320 = vector.broadcast %318 : vector<1x256xf32> to vector<4x256xf32>
    %321 = arith.mulf %319, %320 : vector<4x256xf32>
    %322 = arith.addf %316, %321 : vector<4x256xf32>
    %323 = vector.extract_strided_slice %113 {offsets = [0, 35], sizes = [4, 1], strides = [1, 1]} : vector<4x36xf32> to vector<4x1xf32>
    %324 = vector.extract_strided_slice %112 {offsets = [3, 0], sizes = [1, 256], strides = [1, 1]} : vector<4x256xf32> to vector<1x256xf32>
    %325 = vector.broadcast %323 : vector<4x1xf32> to vector<4x256xf32>
    %326 = vector.broadcast %324 : vector<1x256xf32> to vector<4x256xf32>
    %327 = arith.mulf %325, %326 : vector<4x256xf32>
    %328 = arith.addf %322, %327 : vector<4x256xf32>
    %c2_39 = arith.constant 2 : index
    %c0_40 = arith.constant 0 : index
    %c0_41 = arith.constant 0 : index
    %329 = vector.load %arg4[%c2_39, %c0_40, %c0_41] : memref<4x4x1xf32, #tpu.memory_space<vmem>>, vector<1x4x1xf32>
    %330 = vector.shape_cast %329 : vector<1x4x1xf32> to vector<4x1xf32>
    %331 = vector.broadcast %330 : vector<4x1xf32> to vector<4x256xf32>
    %332 = arith.mulf %328, %331 : vector<4x256xf32>
    %c3_42 = arith.constant 3 : index
    %c0_43 = arith.constant 0 : index
    %c0_44 = arith.constant 0 : index
    %333 = vector.load %arg4[%c3_42, %c0_43, %c0_44] : memref<4x4x1xf32, #tpu.memory_space<vmem>>, vector<1x4x1xf32>
    %334 = vector.shape_cast %333 : vector<1x4x1xf32> to vector<4x1xf32>
    %335 = vector.broadcast %334 : vector<4x1xf32> to vector<4x256xf32>
    %336 = arith.addf %332, %335 : vector<4x256xf32>
    %cst_45 = arith.constant 0.000000e+00 : f32
    %337 = vector.broadcast %cst_45 : f32 to vector<4x256xf32>
    %338 = arith.maximumf %336, %337 : vector<4x256xf32>
    %c0_46 = arith.constant 0 : index
    %c0_47 = arith.constant 0 : index
    %339 = vector.load %arg7[%c0_46, %c0_47] : memref<8x4xf32, #tpu.memory_space<vmem>>, vector<8x4xf32>
    %340 = vector.extract_strided_slice %339 {offsets = [0, 0], sizes = [8, 1], strides = [1, 1]} : vector<8x4xf32> to vector<8x1xf32>
    %341 = vector.extract_strided_slice %338 {offsets = [0, 0], sizes = [1, 256], strides = [1, 1]} : vector<4x256xf32> to vector<1x256xf32>
    %342 = vector.broadcast %340 : vector<8x1xf32> to vector<8x256xf32>
    %343 = vector.broadcast %341 : vector<1x256xf32> to vector<8x256xf32>
    %344 = arith.mulf %342, %343 : vector<8x256xf32>
    %345 = vector.extract_strided_slice %339 {offsets = [0, 1], sizes = [8, 1], strides = [1, 1]} : vector<8x4xf32> to vector<8x1xf32>
    %346 = vector.extract_strided_slice %338 {offsets = [1, 0], sizes = [1, 256], strides = [1, 1]} : vector<4x256xf32> to vector<1x256xf32>
    %347 = vector.broadcast %345 : vector<8x1xf32> to vector<8x256xf32>
    %348 = vector.broadcast %346 : vector<1x256xf32> to vector<8x256xf32>
    %349 = arith.mulf %347, %348 : vector<8x256xf32>
    %350 = arith.addf %344, %349 : vector<8x256xf32>
    %351 = vector.extract_strided_slice %339 {offsets = [0, 2], sizes = [8, 1], strides = [1, 1]} : vector<8x4xf32> to vector<8x1xf32>
    %352 = vector.extract_strided_slice %338 {offsets = [2, 0], sizes = [1, 256], strides = [1, 1]} : vector<4x256xf32> to vector<1x256xf32>
    %353 = vector.broadcast %351 : vector<8x1xf32> to vector<8x256xf32>
    %354 = vector.broadcast %352 : vector<1x256xf32> to vector<8x256xf32>
    %355 = arith.mulf %353, %354 : vector<8x256xf32>
    %356 = arith.addf %350, %355 : vector<8x256xf32>
    %357 = vector.extract_strided_slice %339 {offsets = [0, 3], sizes = [8, 1], strides = [1, 1]} : vector<8x4xf32> to vector<8x1xf32>
    %358 = vector.extract_strided_slice %338 {offsets = [3, 0], sizes = [1, 256], strides = [1, 1]} : vector<4x256xf32> to vector<1x256xf32>
    %359 = vector.broadcast %357 : vector<8x1xf32> to vector<8x256xf32>
    %360 = vector.broadcast %358 : vector<1x256xf32> to vector<8x256xf32>
    %361 = arith.mulf %359, %360 : vector<8x256xf32>
    %362 = arith.addf %356, %361 : vector<8x256xf32>
    %c0_48 = arith.constant 0 : index
    %c0_49 = arith.constant 0 : index
    %363 = vector.load %arg8[%c0_48, %c0_49] : memref<8x1xf32, #tpu.memory_space<vmem>>, vector<8x1xf32>
    %364 = vector.broadcast %363 : vector<8x1xf32> to vector<8x256xf32>
    %365 = arith.addf %362, %364 : vector<8x256xf32>
    %366 = arith.addf %365, %24 : vector<8x256xf32>
    %c0_50 = arith.constant 0 : index
    %c0_51 = arith.constant 0 : index
    %367 = vector.load %arg10[%c0_50, %c0_51] : memref<8x256xf32, #tpu.memory_space<vmem>>, vector<8x256xf32>
    tpu.vector_store %arg10[%c0_50, %c0_51], %366 {strides = array<i32>} : memref<8x256xf32, #tpu.memory_space<vmem>>, vector<8x256xf32>,
    return
  }
  func.func @transform_0(%arg0: i32) -> (i32, i32) {
    %c0_i32 = arith.constant 0 : i32
    %c0_i32_0 = arith.constant 0 : i32
    return %c0_i32, %arg0 : i32, i32
  }
  func.func @transform_1(%arg0: i32) -> (i32, i32, i32) {
    %c0_i32 = arith.constant 0 : i32
    %c0_i32_0 = arith.constant 0 : i32
    %c0_i32_1 = arith.constant 0 : i32
    %c0_i32_2 = arith.constant 0 : i32
    return %c0_i32, %c0_i32_0, %c0_i32_1 : i32, i32, i32
  }
  func.func @transform_2(%arg0: i32) -> (i32, i32) {
    %c0_i32 = arith.constant 0 : i32
    %c0_i32_0 = arith.constant 0 : i32
    %c0_i32_1 = arith.constant 0 : i32
    return %c0_i32, %c0_i32_0 : i32, i32
  }
  func.func @transform_3(%arg0: i32) -> (i32, i32, i32) {
    %c0_i32 = arith.constant 0 : i32
    %c0_i32_0 = arith.constant 0 : i32
    %c0_i32_1 = arith.constant 0 : i32
    %c0_i32_2 = arith.constant 0 : i32
    return %c0_i32, %c0_i32_0, %c0_i32_1 : i32, i32, i32
  }
  func.func @transform_4(%arg0: i32) -> (i32, i32) {
    %c0_i32 = arith.constant 0 : i32
    %c0_i32_0 = arith.constant 0 : i32
    %c0_i32_1 = arith.constant 0 : i32
    return %c0_i32, %c0_i32_0 : i32, i32
  }
  func.func @transform_5(%arg0: i32) -> (i32, i32, i32) {
    %c0_i32 = arith.constant 0 : i32
    %c0_i32_0 = arith.constant 0 : i32
    %c0_i32_1 = arith.constant 0 : i32
    %c0_i32_2 = arith.constant 0 : i32
    return %c0_i32, %c0_i32_0, %c0_i32_1 : i32, i32, i32
  }
  func.func @transform_6(%arg0: i32) -> (i32, i32) {
    %c0_i32 = arith.constant 0 : i32
    %c0_i32_0 = arith.constant 0 : i32
    %c0_i32_1 = arith.constant 0 : i32
    return %c0_i32, %c0_i32_0 : i32, i32
  }
  func.func @transform_7(%arg0: i32) -> (i32, i32) {
    %c0_i32 = arith.constant 0 : i32
    %c0_i32_0 = arith.constant 0 : i32
    %c0_i32_1 = arith.constant 0 : i32
    return %c0_i32, %c0_i32_0 : i32, i32
  }
  func.func @transform_8(%arg0: i32) -> (i32, i32) {
    %c0_i32 = arith.constant 0 : i32
    %c0_i32_0 = arith.constant 0 : i32
    %c0_i32_1 = arith.constant 0 : i32
    return %c0_i32, %c0_i32_0 : i32, i32
  }
  func.func @transform_9(%arg0: i32) -> (i32, i32) {
    %c0_i32 = arith.constant 0 : i32
    %c0_i32_0 = arith.constant 0 : i32
    return %c0_i32, %arg0 : i32, i32
  }
}

</mosaic_0001>

<llo_original>
// kernel: tpu_custom_call.1
$region0: #{tpu_custom_call.1}
  #allocation0 [shape = 'u32[]', space=smem, size = 0x4, offset = 0x4, fixed_abs, tag = 'smem constant byte address 0x4 - core index']
  #allocation1 [shape = 'u32[144,128]{1,0:T(1,128)}', space=vmem, size = 0x12000, scoped, tag = 'internal scratch']
  %s0 = inlined_call_operand.vmem [shape: f32[4,512], index: 0, kind: input, shape index: {}]
  %s1 = inlined_call_operand.vmem [shape: f32[2,4,1], index: 1, kind: input, shape index: {}]
  %s2 = inlined_call_operand.vmem [shape: f32[4,4], index: 2, kind: input, shape index: {}]
  %s3 = inlined_call_operand.vmem [shape: f32[4,4,1], index: 3, kind: input, shape index: {}]
  %s4 = inlined_call_operand.vmem [shape: f32[4,36], index: 4, kind: input, shape index: {}]
  %s5 = inlined_call_operand.vmem [shape: f32[9,1,256], index: 5, kind: input, shape index: {}]
  %s6 = inlined_call_operand.vmem [shape: f32[8,4], index: 6, kind: input, shape index: {}]
  %s7 = inlined_call_operand.vmem [shape: f32[8,1], index: 7, kind: input, shape index: {}]
  %s8 = inlined_call_operand.vmem [shape: f32[8,4], index: 8, kind: input, shape index: {}]
  %s9 = inlined_call_operand.hbm [shape: f32[8,512], index: 9, kind: output, shape index: {}]
  %s10 = sld [smem:[#allocation0]]
  $region69: #{tpu_custom_call.1} parent=0
    _
  %s12 = ssub.s32 1, %s10
  %s13 = scalar_select 0, %s12, %s10
  $region1: #{tpu_custom_call.1} parent=0
    #allocation2 [shape = 'u8[16384]{0}', space=vmem, size = 0x4000, scoped, tag = 'output window, operand 0']
    #allocation3 [shape = 's32[2]{0}', space=sflag, size = 0x8, scoped, tag = 'scoped memory for tpu_custom_call.1']
    %14 = vsyncpa [#allocation3], 0
    %s15 = scalar_lea.sflag [#allocation3], 1
    %16 = vsyncpa %s15, 0
    loop: start=0, step=1, limit=4
    $region2: #{tpu_custom_call.1} parent=1 // loop_pre_header
      _
    $region3: #{tpu_custom_call.1} parent=1 // loop_header
      %s18 = sphi 0, %s22
      %p19 = scmp.ge.s32.totalorder %s18, 4
      %s28 = sphi 0, %s30
      %s31 = sphi 0, %s28
      %s32 = sphi 0, %s31
      %s48 = sphi 0, %s32
      %s52 = sphi 0, %s52
      %s54 = sphi 0, %s52
      %s55 = sphi 0, %s54
      %s69 = sphi 0, %s55
      %s73 = sphi 0, %s73
      %s75 = sphi 0, %s73
      %s76 = sphi 0, %s75
      %s90 = sphi 0, %s76
      %s94 = sphi 0, %s94
      %s96 = sphi 0, %s94
      %s97 = sphi 0, %s96
      %s111 = sphi 0, %s97
      %s115 = sphi 0, %s115
      %s117 = sphi 0, %s115
      %s118 = sphi 0, %s117
      %s132 = sphi 0, %s118
      %s136 = sphi 0, %s136
      %s138 = sphi 0, %s136
      %s139 = sphi 0, %s138
      %s153 = sphi 0, %s139
      %s157 = sphi 0, %s157
      %s159 = sphi 0, %s157
      %s160 = sphi 0, %s159
      %s174 = sphi 0, %s160
      %s178 = sphi 0, %s178
      %s180 = sphi 0, %s178
      %s181 = sphi 0, %s180
      %s195 = sphi 0, %s181
      %s199 = sphi 0, %s199
      %s201 = sphi 0, %s199
      %s202 = sphi 0, %s201
      %s216 = sphi 0, %s202
      %s222 = sphi 0, %s224
      %s225 = sphi 0, %s222
      %s226 = sphi 0, %s225
      %s242 = sphi 0, %s226
    $region4: #{tpu_custom_call.1} parent=1 // loop_header_branch
      %21 = sbr.rel (%p19) target = $region8
    $region5: #{tpu_custom_call.1} parent=1 // loop_body
      %s23 = ssub.s32 %s18, 1
      %s24 = ssub.s32 %s18, 2
      %s25 = sadd.s32 %s18, 1
      %s26 = ssub.s32 %s18, %s25
      %p27 = scmp.eq.s32.totalorder %s26, 0
      %s29 = sadd.s32 %s28, 1
      %s30 = scalar_select %p27, %s28, %s29
      %p33 = pneg %p27
      %p34 = scmp.eq.s32.totalorder %s18, 1
      %p35 = por %p33, %p34
      %p36 = scmp.ne.s32.totalorder %s28, %s31
      %p37 = scmp.eq.s32.totalorder %s18, 0
      %p38 = por %p36, %p37
      %p39 = scmp.ne.s32.totalorder %s28, %s31
      %p40 = scmp.eq.s32.totalorder %s23, 1
      %p41 = por %p39, %p40
      %p42 = scmp.ne.s32.totalorder %s31, %s32
      %p43 = scmp.eq.s32.totalorder %s23, 0
      %p44 = por %p42, %p43
      %p45 = scmp.ne.s32.totalorder %s31, %s32
      %p46 = scmp.eq.s32.totalorder %s24, 1
      %p47 = por %p45, %p46
      %p49 = scmp.ne.s32.totalorder %s32, %s48
      %p50 = scmp.eq.s32.totalorder %s24, 0
      %p51 = por %p49, %p50
      %s53 = sadd.s32 %s52, 1
      %p56 = scmp.eq.s32.totalorder %s18, 1
      %p57 = scmp.ne.s32.totalorder %s52, %s54
      %p58 = scmp.eq.s32.totalorder %s18, 0
      %p59 = por %p57, %p58
      %p60 = scmp.ne.s32.totalorder %s52, %s54
      %p61 = scmp.eq.s32.totalorder %s23, 1
      %p62 = por %p60, %p61
      %p63 = scmp.ne.s32.totalorder %s54, %s55
      %p64 = scmp.eq.s32.totalorder %s23, 0
      %p65 = por %p63, %p64
      %p66 = scmp.ne.s32.totalorder %s54, %s55
      %p67 = scmp.eq.s32.totalorder %s24, 1
      %p68 = por %p66, %p67
      %p70 = scmp.ne.s32.totalorder %s55, %s69
      %p71 = scmp.eq.s32.totalorder %s24, 0
      %p72 = por %p70, %p71
      %s74 = sadd.s32 %s73, 1
      %p77 = scmp.eq.s32.totalorder %s18, 1
      %p78 = scmp.ne.s32.totalorder %s73, %s75
      %p79 = scmp.eq.s32.totalorder %s18, 0
      %p80 = por %p78, %p79
      %p81 = scmp.ne.s32.totalorder %s73, %s75
      %p82 = scmp.eq.s32.totalorder %s23, 1
      %p83 = por %p81, %p82
      %p84 = scmp.ne.s32.totalorder %s75, %s76
      %p85 = scmp.eq.s32.totalorder %s23, 0
      %p86 = por %p84, %p85
      %p87 = scmp.ne.s32.totalorder %s75, %s76
      %p88 = scmp.eq.s32.totalorder %s24, 1
      %p89 = por %p87, %p88
      %p91 = scmp.ne.s32.totalorder %s76, %s90
      %p92 = scmp.eq.s32.totalorder %s24, 0
      %p93 = por %p91, %p92
      %s95 = sadd.s32 %s94, 1
      %p98 = scmp.eq.s32.totalorder %s18, 1
      %p99 = scmp.ne.s32.totalorder %s94, %s96
      %p100 = scmp.eq.s32.totalorder %s18, 0
      %p101 = por %p99, %p100
      %p102 = scmp.ne.s32.totalorder %s94, %s96
      %p103 = scmp.eq.s32.totalorder %s23, 1
      %p104 = por %p102, %p103
      %p105 = scmp.ne.s32.totalorder %s96, %s97
      %p106 = scmp.eq.s32.totalorder %s23, 0
      %p107 = por %p105, %p106
      %p108 = scmp.ne.s32.totalorder %s96, %s97
      %p109 = scmp.eq.s32.totalorder %s24, 1
      %p110 = por %p108, %p109
      %p112 = scmp.ne.s32.totalorder %s97, %s111
      %p113 = scmp.eq.s32.totalorder %s24, 0
      %p114 = por %p112, %p113
      %s116 = sadd.s32 %s115, 1
      %p119 = scmp.eq.s32.totalorder %s18, 1
      %p120 = scmp.ne.s32.totalorder %s115, %s117
      %p121 = scmp.eq.s32.totalorder %s18, 0
      %p122 = por %p120, %p121
      %p123 = scmp.ne.s32.totalorder %s115, %s117
      %p124 = scmp.eq.s32.totalorder %s23, 1
      %p125 = por %p123, %p124
      %p126 = scmp.ne.s32.totalorder %s117, %s118
      %p127 = scmp.eq.s32.totalorder %s23, 0
      %p128 = por %p126, %p127
      %p129 = scmp.ne.s32.totalorder %s117, %s118
      %p130 = scmp.eq.s32.totalorder %s24, 1
      %p131 = por %p129, %p130
      %p133 = scmp.ne.s32.totalorder %s118, %s132
      %p134 = scmp.eq.s32.totalorder %s24, 0
      %p135 = por %p133, %p134
      %s137 = sadd.s32 %s136, 1
      %p140 = scmp.eq.s32.totalorder %s18, 1
      %p141 = scmp.ne.s32.totalorder %s136, %s138
      %p142 = scmp.eq.s32.totalorder %s18, 0
      %p143 = por %p141, %p142
      %p144 = scmp.ne.s32.totalorder %s136, %s138
      %p145 = scmp.eq.s32.totalorder %s23, 1
      %p146 = por %p144, %p145
      %p147 = scmp.ne.s32.totalorder %s138, %s139
      %p148 = scmp.eq.s32.totalorder %s23, 0
      %p149 = por %p147, %p148
      %p150 = scmp.ne.s32.totalorder %s138, %s139
      %p151 = scmp.eq.s32.totalorder %s24, 1
      %p152 = por %p150, %p151
      %p154 = scmp.ne.s32.totalorder %s139, %s153
      %p155 = scmp.eq.s32.totalorder %s24, 0
      %p156 = por %p154, %p155
      %s158 = sadd.s32 %s157, 1
      %p161 = scmp.eq.s32.totalorder %s18, 1
      %p162 = scmp.ne.s32.totalorder %s157, %s159
      %p163 = scmp.eq.s32.totalorder %s18, 0
      %p164 = por %p162, %p163
      %p165 = scmp.ne.s32.totalorder %s157, %s159
      %p166 = scmp.eq.s32.totalorder %s23, 1
      %p167 = por %p165, %p166
      %p168 = scmp.ne.s32.totalorder %s159, %s160
      %p169 = scmp.eq.s32.totalorder %s23, 0
      %p170 = por %p168, %p169
      %p171 = scmp.ne.s32.totalorder %s159, %s160
      %p172 = scmp.eq.s32.totalorder %s24, 1
      %p173 = por %p171, %p172
      %p175 = scmp.ne.s32.totalorder %s160, %s174
      %p176 = scmp.eq.s32.totalorder %s24, 0
      %p177 = por %p175, %p176
      %s179 = sadd.s32 %s178, 1
      %p182 = scmp.eq.s32.totalorder %s18, 1
      %p183 = scmp.ne.s32.totalorder %s178, %s180
      %p184 = scmp.eq.s32.totalorder %s18, 0
      %p185 = por %p183, %p184
      %p186 = scmp.ne.s32.totalorder %s178, %s180
      %p187 = scmp.eq.s32.totalorder %s23, 1
      %p188 = por %p186, %p187
      %p189 = scmp.ne.s32.totalorder %s180, %s181
      %p190 = scmp.eq.s32.totalorder %s23, 0
      %p191 = por %p189, %p190
      %p192 = scmp.ne.s32.totalorder %s180, %s181
      %p193 = scmp.eq.s32.totalorder %s24, 1
      %p194 = por %p192, %p193
      %p196 = scmp.ne.s32.totalorder %s181, %s195
      %p197 = scmp.eq.s32.totalorder %s24, 0
      %p198 = por %p196, %p197
      %s200 = sadd.s32 %s199, 1
      %p203 = scmp.eq.s32.totalorder %s18, 1
      %p204 = scmp.ne.s32.totalorder %s199, %s201
      %p205 = scmp.eq.s32.totalorder %s18, 0
      %p206 = por %p204, %p205
      %p207 = scmp.ne.s32.totalorder %s199, %s201
      %p208 = scmp.eq.s32.totalorder %s23, 1
      %p209 = por %p207, %p208
      %p210 = scmp.ne.s32.totalorder %s201, %s202
      %p211 = scmp.eq.s32.totalorder %s23, 0
      %p212 = por %p210, %p211
      %p213 = scmp.ne.s32.totalorder %s201, %s202
      %p214 = scmp.eq.s32.totalorder %s24, 1
      %p215 = por %p213, %p214
      %p217 = scmp.ne.s32.totalorder %s202, %s216
      %p218 = scmp.eq.s32.totalorder %s24, 0
      %p219 = por %p217, %p218
      %s220 = ssub.s32 %s18, %s25
      %p221 = scmp.eq.s32.totalorder %s220, 0
      %s223 = sadd.s32 %s222, 1
      %s224 = scalar_select %p221, %s222, %s223
      %p227 = pneg %p221
      %p228 = scmp.eq.s32.totalorder %s18, 1
      %p229 = por %p227, %p228
      %p230 = scmp.ne.s32.totalorder %s222, %s225
      %p231 = scmp.eq.s32.totalorder %s18, 0
      %p232 = por %p230, %p231
      %p233 = scmp.ne.s32.totalorder %s222, %s225
      %p234 = scmp.eq.s32.totalorder %s23, 1
      %p235 = por %p233, %p234
      %p236 = scmp.ne.s32.totalorder %s225, %s226
      %p237 = scmp.eq.s32.totalorder %s23, 0
      %p238 = por %p236, %p237
      %p239 = scmp.ne.s32.totalorder %s225, %s226
      %p240 = scmp.eq.s32.totalorder %s24, 1
      %p241 = por %p239, %p240
      %p243 = scmp.ne.s32.totalorder %s226, %s242
      %p244 = scmp.eq.s32.totalorder %s24, 0
      %p245 = por %p243, %p244
      %p246 = scmp.le.s32.totalorder 1, %s18
      %p247 = scmp.lt.s32.totalorder %s18, 3
      %p248 = pnand %p246, %p247
      %p249 = pneg %p248
      // Predicated region
      $region9: #{tpu_custom_call.1} parent=5 // pred_check
        _
      $region10: #{tpu_custom_call.1} parent=5 // pred_check_branch
        %251 = sbr.rel (%p248) target = $region12
      $region11: #{tpu_custom_call.1} parent=5 // pred_region
        %s252 = ssub.s32 %s18, 1
        // Predicated region
        $region13: #{tpu_custom_call.1} parent=11 // pred_check
          %p253 = pneg %p65
        $region14: #{tpu_custom_call.1} parent=11 // pred_check_branch
          %255 = sbr.rel (%p253) target = $region16
        $region15: #{tpu_custom_call.1} parent=11 // pred_region
          _
        $region16: #{tpu_custom_call.1} parent=11 // pred_fallthru
          _
        // Predicated region
        $region17: #{tpu_custom_call.1} parent=11 // pred_check
          %p256 = pneg %p86
        $region18: #{tpu_custom_call.1} parent=11 // pred_check_branch
          %258 = sbr.rel (%p256) target = $region20
        $region19: #{tpu_custom_call.1} parent=11 // pred_region
          _
        $region20: #{tpu_custom_call.1} parent=11 // pred_fallthru
          _
        // Predicated region
        $region21: #{tpu_custom_call.1} parent=11 // pred_check
          %p259 = pneg %p107
        $region22: #{tpu_custom_call.1} parent=11 // pred_check_branch
          %261 = sbr.rel (%p259) target = $region24
        $region23: #{tpu_custom_call.1} parent=11 // pred_region
          _
        $region24: #{tpu_custom_call.1} parent=11 // pred_fallthru
          _
        // Predicated region
        $region25: #{tpu_custom_call.1} parent=11 // pred_check
          %p262 = pneg %p128
        $region26: #{tpu_custom_call.1} parent=11 // pred_check_branch
          %264 = sbr.rel (%p262) target = $region28
        $region27: #{tpu_custom_call.1} parent=11 // pred_region
          _
        $region28: #{tpu_custom_call.1} parent=11 // pred_fallthru
          _
        // Predicated region
        $region29: #{tpu_custom_call.1} parent=11 // pred_check
          %p265 = pneg %p149
        $region30: #{tpu_custom_call.1} parent=11 // pred_check_branch
          %267 = sbr.rel (%p265) target = $region32
        $region31: #{tpu_custom_call.1} parent=11 // pred_region
          _
        $region32: #{tpu_custom_call.1} parent=11 // pred_fallthru
          _
        // Predicated region
        $region33: #{tpu_custom_call.1} parent=11 // pred_check
          %p268 = pneg %p170
        $region34: #{tpu_custom_call.1} parent=11 // pred_check_branch
          %270 = sbr.rel (%p268) target = $region36
        $region35: #{tpu_custom_call.1} parent=11 // pred_region
          _
        $region36: #{tpu_custom_call.1} parent=11 // pred_fallthru
          _
        // Predicated region
        $region37: #{tpu_custom_call.1} parent=11 // pred_check
          %p271 = pneg %p191
        $region38: #{tpu_custom_call.1} parent=11 // pred_check_branch
          %273 = sbr.rel (%p271) target = $region40
        $region39: #{tpu_custom_call.1} parent=11 // pred_region
          _
        $region40: #{tpu_custom_call.1} parent=11 // pred_fallthru
          _
        // Predicated region
        $region41: #{tpu_custom_call.1} parent=11 // pred_check
          %p274 = pneg %p212
        $region42: #{tpu_custom_call.1} parent=11 // pred_check_branch
          %276 = sbr.rel (%p274) target = $region44
        $region43: #{tpu_custom_call.1} parent=11 // pred_region
          _
        $region44: #{tpu_custom_call.1} parent=11 // pred_fallthru
          _
      $region12: #{tpu_custom_call.1} parent=5 // pred_fallthru
        _
      %p277 = scmp.lt.s32.totalorder %s18, 2
      // Predicated region
      $region45: #{tpu_custom_call.1} parent=5 // pred_check
        %p278 = pneg %p277
      $region46: #{tpu_custom_call.1} parent=5 // pred_check_branch
        %280 = sbr.rel (%p278) target = $region48
      $region47: #{tpu_custom_call.1} parent=5 // pred_region
        // Predicated region
        $region49: #{tpu_custom_call.1} parent=47 // pred_check
          %p281 = pneg %p38
        $region50: #{tpu_custom_call.1} parent=47 // pred_check_branch
          %283 = sbr.rel (%p281) target = $region52
        $region51: #{tpu_custom_call.1} parent=47 // pred_region
          %s284 = smul.u32 2, %s18
          %p285 = scmp.lt.s32.totalorder %s284, 3
          %s286 = scalar_select %p285, %s284, 3
          %s287 = smul.addr %s286, 4
          %s288 = scalar_lea.vmem %s0, %s287
          %s289 = smul.u32 2, %s18
        $region52: #{tpu_custom_call.1} parent=47 // pred_fallthru
          _
      $region48: #{tpu_custom_call.1} parent=5 // pred_fallthru
        _
      %p290 = scmp.le.s32.totalorder 1, %s18
      %p291 = scmp.lt.s32.totalorder %s18, 3
      %p292 = pnand %p290, %p291
      %p293 = pneg %p292
      // Predicated region
      $region53: #{tpu_custom_call.1} parent=5 // pred_check
        _
      $region54: #{tpu_custom_call.1} parent=5 // pred_check_branch
        %295 = sbr.rel (%p292) target = $region56
      $region55: #{tpu_custom_call.1} parent=5 // pred_region
        %s296 = ssub.s32 %s18, 1
        %s297 = smul.u32 2, %s23
        %p298 = scmp.lt.s32.totalorder %s297, 3
        %s299 = scalar_select %p298, %s297, 3
        %s300 = smul.addr %s299, 4
        %s301 = scalar_lea.vmem %s0, %s300
        %p302 = pneg %p44
        %p303 = pneg %p41
        %p304 = pneg %p65
        %p305 = pneg %p62
        %p306 = pneg %p86
        %p307 = pneg %p83
        %p308 = pneg %p107
        %p309 = pneg %p104
        %p310 = pneg %p128
        %p311 = pneg %p125
        %p312 = pneg %p149
        %p313 = pneg %p146
        %p314 = pneg %p170
        %p315 = pneg %p167
        %p316 = pneg %p191
        %p317 = pneg %p188
        %p318 = pneg %p212
        %p319 = pneg %p209
        %p320 = pneg %p238
        %p321 = pneg %p235
        %s322 = sand.u32 %s225, 1
        %s323 = scalar_lea.sflag [#allocation3], %s322
        %s324 = sand.u32 %s225, 1
        %s325 = smul.addr %s324, 16
        %s326 = scalar_lea.vmem [#allocation2], %s325
        %s327 = smul.u32 2, %s23
        %p328 = scmp.lt.s32.totalorder %s327, 3
        %s329 = scalar_select %p328, %s327, 3
        %s330 = smul.addr %s329, 4
        %s331 = scalar_lea.vmem %s0, %s330
        %s332 = smul.u32 2, %s23
        %s333 = smul.u32 2, %s23
        %v334 = vld [vmem:[%s331] sm:$0xff]
        %v335 = vld [vmem:[%s8] sm:$0xff]
        %337 = vset.pattern.permute.xlu0 0
        %338 = vperm.xlu0 %337, %v335
        %v339 = vpop.permute.xlu0 %338
        %v342 = vlaneseq
        %v343 = vshrl.u32 %v342, 7
        %v344 = vsub.s32 0, %v343
        %v345 = vrot.slane %v334, %v344
        %v346 = vlaneseq
        %v347 = vshrl.u32 %v346, 7
        %v348 = vsub.s32 4, %v347
        %v349 = vrot.slane %v334, %v348
        %v352 = vlaneseq
        %v353 = vshrl.u32 %v352, 7
        %v354 = vsub.s32 0, %v353
        %v355 = vrot.slane %v345, %v354
        %v356 = vlaneseq
        %v357 = vshrl.u32 %v356, 7
        %v358 = vsub.s32 0, %v357
        %v359 = vrot.slane %v349, %v358
        %v360 = vmul.f32 %v339, %v355
        %v361 = vmul.f32 %v339, %v359
        %362 = vset.pattern.permute.xlu0 1
        %363 = vperm.xlu0 %362, %v335
        %v364 = vpop.permute.xlu0 %363
        %v366 = vlaneseq
        %v367 = vshrl.u32 %v366, 7
        %v368 = vsub.s32 1, %v367
        %v369 = vrot.slane %v334, %v368
        %v370 = vlaneseq
        %v371 = vshrl.u32 %v370, 7
        %v372 = vsub.s32 5, %v371
        %v373 = vrot.slane %v334, %v372
        %v376 = vlaneseq
        %v377 = vshrl.u32 %v376, 7
        %v378 = vsub.s32 1, %v377
        %v379 = vrot.slane %v369, %v378
        %v380 = vlaneseq
        %v381 = vshrl.u32 %v380, 7
        %v382 = vsub.s32 1, %v381
        %v383 = vrot.slane %v373, %v382
        %v384 = vmul.f32 %v364, %v379
        %v385 = vmul.f32 %v364, %v383
        %v386 = vadd.f32 %v360, %v384
        %v387 = vadd.f32 %v361, %v385
        %388 = vset.pattern.permute.xlu0 2
        %389 = vperm.xlu0 %388, %v335
        %v390 = vpop.permute.xlu0 %389
        %v392 = vlaneseq
        %v393 = vshrl.u32 %v392, 7
        %v394 = vsub.s32 2, %v393
        %v395 = vrot.slane %v334, %v394
        %v396 = vlaneseq
        %v397 = vshrl.u32 %v396, 7
        %v398 = vsub.s32 6, %v397
        %v399 = vrot.slane %v334, %v398
        %v402 = vlaneseq
        %v403 = vshrl.u32 %v402, 7
        %v404 = vsub.s32 2, %v403
        %v405 = vrot.slane %v395, %v404
        %v406 = vlaneseq
        %v407 = vshrl.u32 %v406, 7
        %v408 = vsub.s32 2, %v407
        %v409 = vrot.slane %v399, %v408
        %v410 = vmul.f32 %v390, %v405
        %v411 = vmul.f32 %v390, %v409
        %v412 = vadd.f32 %v386, %v410
        %v413 = vadd.f32 %v387, %v411
        %414 = vset.pattern.permute.xlu0 3
        %415 = vperm.xlu0 %414, %v335
        %v416 = vpop.permute.xlu0 %415
        %v418 = vlaneseq
        %v419 = vshrl.u32 %v418, 7
        %v420 = vsub.s32 3, %v419
        %v421 = vrot.slane %v334, %v420
        %v422 = vlaneseq
        %v423 = vshrl.u32 %v422, 7
        %v424 = vsub.s32 7, %v423
        %v425 = vrot.slane %v334, %v424
        %v428 = vlaneseq
        %v429 = vshrl.u32 %v428, 7
        %v430 = vsub.s32 3, %v429
        %v431 = vrot.slane %v421, %v430
        %v432 = vlaneseq
        %v433 = vshrl.u32 %v432, 7
        %v434 = vsub.s32 3, %v433
        %v435 = vrot.slane %v425, %v434
        %v436 = vmul.f32 %v416, %v431
        %v437 = vmul.f32 %v416, %v435
        %v438 = vadd.f32 %v412, %v436
        %v439 = vadd.f32 %v413, %v437
        %v440 = vld [vmem:[%s1] sm:$0xf]
        %442 = vset.pattern.permute.xlu0 0
        %443 = vperm.xlu0 %442, %v440
        %v444 = vpop.permute.xlu0 %443
        %v446 = vunpack.c.l.s4 839922192
        %v447 = vunpack.c.0.s8 %v446
        %v448 = vlaneseq
        %v449 = vshrl.u32 %v448, 7
        %v450 = vsub.s32 %v447, %v449
        %v451 = vrot.slane %v444, %v450
        %v453 = vmul.f32 %v334, %v451
        %s454 = scalar_lea.vmem %s1, 4
        %v455 = vld [vmem:[%s454] sm:$0xf]
        %457 = vset.pattern.permute.xlu0 0
        %458 = vperm.xlu0 %457, %v455
        %v459 = vpop.permute.xlu0 %458
        %v461 = vunpack.c.l.s4 839922192
        %v462 = vunpack.c.0.s8 %v461
        %v463 = vlaneseq
        %v464 = vshrl.u32 %v463, 7
        %v465 = vsub.s32 %v462, %v464
        %v466 = vrot.slane %v459, %v465
        %v468 = vadd.f32 %v453, %v466
        %v469 = vmax.f32 %v468, 0.0
        %v470 = vld [vmem:[%s2] sm:$0xf]
        %472 = vset.pattern.permute.xlu0 0
        %473 = vperm.xlu0 %472, %v470
        %v474 = vpop.permute.xlu0 %473
        %v477 = vlaneseq
        %v478 = vshrl.u32 %v477, 7
        %v479 = vsub.s32 0, %v478
        %v480 = vrot.slane %v469, %v479
        %v481 = vlaneseq
        %v482 = vshrl.u32 %v481, 7
        %v483 = vsub.s32 4, %v482
        %v484 = vrot.slane %v469, %v483
        %v487 = vlaneseq
        %v488 = vshrl.u32 %v487, 7
        %v489 = vsub.s32 0, %v488
        %v490 = vrot.slane %v480, %v489
        %v491 = vlaneseq
        %v492 = vshrl.u32 %v491, 7
        %v493 = vsub.s32 0, %v492
        %v494 = vrot.slane %v484, %v493
        %v495 = vmul.f32 %v474, %v490
        %v496 = vmul.f32 %v474, %v494
        %497 = vset.pattern.permute.xlu0 1
        %498 = vperm.xlu0 %497, %v470
        %v499 = vpop.permute.xlu0 %498
        %v501 = vlaneseq
        %v502 = vshrl.u32 %v501, 7
        %v503 = vsub.s32 1, %v502
        %v504 = vrot.slane %v469, %v503
        %v505 = vlaneseq
        %v506 = vshrl.u32 %v505, 7
        %v507 = vsub.s32 5, %v506
        %v508 = vrot.slane %v469, %v507
        %v511 = vlaneseq
        %v512 = vshrl.u32 %v511, 7
        %v513 = vsub.s32 1, %v512
        %v514 = vrot.slane %v504, %v513
        %v515 = vlaneseq
        %v516 = vshrl.u32 %v515, 7
        %v517 = vsub.s32 1, %v516
        %v518 = vrot.slane %v508, %v517
        %v519 = vmul.f32 %v499, %v514
        %v520 = vmul.f32 %v499, %v518
        %v521 = vadd.f32 %v495, %v519
        %v522 = vadd.f32 %v496, %v520
        %523 = vset.pattern.permute.xlu0 2
        %524 = vperm.xlu0 %523, %v470
        %v525 = vpop.permute.xlu0 %524
        %v527 = vlaneseq
        %v528 = vshrl.u32 %v527, 7
        %v529 = vsub.s32 2, %v528
        %v530 = vrot.slane %v469, %v529
        %v531 = vlaneseq
        %v532 = vshrl.u32 %v531, 7
        %v533 = vsub.s32 6, %v532
        %v534 = vrot.slane %v469, %v533
        %v537 = vlaneseq
        %v538 = vshrl.u32 %v537, 7
        %v539 = vsub.s32 2, %v538
        %v540 = vrot.slane %v530, %v539
        %v541 = vlaneseq
        %v542 = vshrl.u32 %v541, 7
        %v543 = vsub.s32 2, %v542
        %v544 = vrot.slane %v534, %v543
        %v545 = vmul.f32 %v525, %v540
        %v546 = vmul.f32 %v525, %v544
        %v547 = vadd.f32 %v521, %v545
        %v548 = vadd.f32 %v522, %v546
        %549 = vset.pattern.permute.xlu0 3
        %550 = vperm.xlu0 %549, %v470
        %v551 = vpop.permute.xlu0 %550
        %v553 = vlaneseq
        %v554 = vshrl.u32 %v553, 7
        %v555 = vsub.s32 3, %v554
        %v556 = vrot.slane %v469, %v555
        %v557 = vlaneseq
        %v558 = vshrl.u32 %v557, 7
        %v559 = vsub.s32 7, %v558
        %v560 = vrot.slane %v469, %v559
        %v563 = vlaneseq
        %v564 = vshrl.u32 %v563, 7
        %v565 = vsub.s32 3, %v564
        %v566 = vrot.slane %v556, %v565
        %v567 = vlaneseq
        %v568 = vshrl.u32 %v567, 7
        %v569 = vsub.s32 3, %v568
        %v570 = vrot.slane %v560, %v569
        %v571 = vmul.f32 %v551, %v566
        %v572 = vmul.f32 %v551, %v570
        %v573 = vadd.f32 %v547, %v571
        %v574 = vadd.f32 %v548, %v572
        %v575 = vld [vmem:[%s3] sm:$0xf]
        %577 = vset.pattern.permute.xlu0 0
        %578 = vperm.xlu0 %577, %v575
        %v579 = vpop.permute.xlu0 %578
        %v581 = vmul.f32 %v573, %v579
        %v582 = vmul.f32 %v574, %v579
        %s583 = scalar_lea.vmem %s3, 4
        %v584 = vld [vmem:[%s583] sm:$0xf]
        %586 = vset.pattern.permute.xlu0 0
        %587 = vperm.xlu0 %586, %v584
        %v588 = vpop.permute.xlu0 %587
        %v590 = vadd.f32 %v581, %v588
        %v591 = vadd.f32 %v582, %v588
        %v592 = vmax.f32 %v590, 0.0
        %v593 = vmax.f32 %v591, 0.0
        %594 = vrot.lane.b32.xlu0 %v592, 17
        %v595 = vpop.permute.xlu0 %594
        %596 = vrot.lane.b32.xlu0 %v593, 17
        %v597 = vpop.permute.xlu0 %596
        %v598 = vlaneseq
        %v599 = vand.u32 %v598, 127
        %vm600 = vcmp.lt.s32.totalorder %v599, 17
        %v601 = vsel %vm600, %v595, %v597
        %v602 = vsel %vm600, %v597, %v595
        %v603 = vld [vmem:[%s5] sm:$0x3]
        %v605 = vlaneseq
        %v606 = vshrl.u32 %v605, 7
        %v607 = vsub.s32 0, %v606
        %v608 = vrot.slane %v603, %v607
        %v609 = vlaneseq
        %v610 = vshrl.u32 %v609, 7
        %v611 = vsub.s32 1, %v610
        %v612 = vrot.slane %v603, %v611
        %v615 = vmul.f32 %v602, %v608
        %v616 = vmul.f32 %v601, %v612
        %617 = vrot.lane.b32.xlu0 %v592, 16
        %v618 = vpop.permute.xlu0 %617
        %619 = vrot.lane.b32.xlu0 %v593, 16
        %v620 = vpop.permute.xlu0 %619
        %vm621 = vcmp.lt.s32.totalorder %v599, 16
        %v622 = vsel %vm621, %v618, %v620
        %v623 = vsel %vm621, %v620, %v618
        %s624 = scalar_lea.vmem %s5, 2
        %v625 = vld [vmem:[%s624] sm:$0x3]
        %v627 = vlaneseq
        %v628 = vshrl.u32 %v627, 7
        %v629 = vsub.s32 0, %v628
        %v630 = vrot.slane %v625, %v629
        %v631 = vlaneseq
        %v632 = vshrl.u32 %v631, 7
        %v633 = vsub.s32 1, %v632
        %v634 = vrot.slane %v625, %v633
        %v637 = vmul.f32 %v623, %v630
        %v638 = vmul.f32 %v622, %v634
        %639 = vrot.lane.b32.xlu0 %v592, 15
        %v640 = vpop.permute.xlu0 %639
        %641 = vrot.lane.b32.xlu0 %v593, 15
        %v642 = vpop.permute.xlu0 %641
        %vm643 = vcmp.lt.s32.totalorder %v599, 15
        %v644 = vsel %vm643, %v640, %v642
        %v645 = vsel %vm643, %v642, %v640
        %s646 = scalar_lea.vmem %s5, 4
        %v647 = vld [vmem:[%s646] sm:$0x3]
        %v649 = vlaneseq
        %v650 = vshrl.u32 %v649, 7
        %v651 = vsub.s32 0, %v650
        %v652 = vrot.slane %v647, %v651
        %v653 = vlaneseq
        %v654 = vshrl.u32 %v653, 7
        %v655 = vsub.s32 1, %v654
        %v656 = vrot.slane %v647, %v655
        %v659 = vmul.f32 %v645, %v652
        %v660 = vmul.f32 %v644, %v656
        %661 = vrot.lane.b32.xlu0 %v592, 1
        %v662 = vpop.permute.xlu0 %661
        %663 = vrot.lane.b32.xlu0 %v593, 1
        %v664 = vpop.permute.xlu0 %663
        %vm665 = vcmp.lt.s32.totalorder %v599, 1
        %v666 = vsel %vm665, %v662, %v664
        %v667 = vsel %vm665, %v664, %v662
        %s668 = scalar_lea.vmem %s5, 6
        %v669 = vld [vmem:[%s668] sm:$0x3]
        %v671 = vlaneseq
        %v672 = vshrl.u32 %v671, 7
        %v673 = vsub.s32 0, %v672
        %v674 = vrot.slane %v669, %v673
        %v675 = vlaneseq
        %v676 = vshrl.u32 %v675, 7
        %v677 = vsub.s32 1, %v676
        %v678 = vrot.slane %v669, %v677
        %v681 = vmul.f32 %v667, %v674
        %v682 = vmul.f32 %v666, %v678
        %s683 = scalar_lea.vmem %s5, 8
        %v684 = vld [vmem:[%s683] sm:$0x3]
        %v686 = vlaneseq
        %v687 = vshrl.u32 %v686, 7
        %v688 = vsub.s32 0, %v687
        %v689 = vrot.slane %v684, %v688
        %v690 = vlaneseq
        %v691 = vshrl.u32 %v690, 7
        %v692 = vsub.s32 1, %v691
        %v693 = vrot.slane %v684, %v692
        %v696 = vmul.f32 %v592, %v689
        %v697 = vmul.f32 %v593, %v693
        %698 = vrot.lane.b32.xlu0 %v592, 127
        %v699 = vpop.permute.xlu0 %698
        %700 = vrot.lane.b32.xlu0 %v593, 127
        %v701 = vpop.permute.xlu0 %700
        %vm702 = vcmp.lt.s32.totalorder %v599, 127
        %v703 = vsel %vm702, %v699, %v701
        %v704 = vsel %vm702, %v701, %v699
        %s705 = scalar_lea.vmem %s5, 10
        %v706 = vld [vmem:[%s705] sm:$0x3]
        %v708 = vlaneseq
        %v709 = vshrl.u32 %v708, 7
        %v710 = vsub.s32 0, %v709
        %v711 = vrot.slane %v706, %v710
        %v712 = vlaneseq
        %v713 = vshrl.u32 %v712, 7
        %v714 = vsub.s32 1, %v713
        %v715 = vrot.slane %v706, %v714
        %v718 = vmul.f32 %v703, %v711
        %v719 = vmul.f32 %v704, %v715
        %720 = vrot.lane.b32.xlu0 %v592, 113
        %v721 = vpop.permute.xlu0 %720
        %722 = vrot.lane.b32.xlu0 %v593, 113
        %v723 = vpop.permute.xlu0 %722
        %vm724 = vcmp.lt.s32.totalorder %v599, 113
        %v725 = vsel %vm724, %v721, %v723
        %v726 = vsel %vm724, %v723, %v721
        %s727 = scalar_lea.vmem %s5, 12
        %v728 = vld [vmem:[%s727] sm:$0x3]
        %v730 = vlaneseq
        %v731 = vshrl.u32 %v730, 7
        %v732 = vsub.s32 0, %v731
        %v733 = vrot.slane %v728, %v732
        %v734 = vlaneseq
        %v735 = vshrl.u32 %v734, 7
        %v736 = vsub.s32 1, %v735
        %v737 = vrot.slane %v728, %v736
        %v740 = vmul.f32 %v725, %v733
        %v741 = vmul.f32 %v726, %v737
        %742 = vrot.lane.b32.xlu0 %v592, 112
        %v743 = vpop.permute.xlu0 %742
        %744 = vrot.lane.b32.xlu0 %v593, 112
        %v745 = vpop.permute.xlu0 %744
        %vm746 = vcmp.lt.s32.totalorder %v599, 112
        %v747 = vsel %vm746, %v743, %v745
        %v748 = vsel %vm746, %v745, %v743
        %s749 = scalar_lea.vmem %s5, 14
        %v750 = vld [vmem:[%s749] sm:$0x3]
        %v752 = vlaneseq
        %v753 = vshrl.u32 %v752, 7
        %v754 = vsub.s32 0, %v753
        %v755 = vrot.slane %v750, %v754
        %v756 = vlaneseq
        %v757 = vshrl.u32 %v756, 7
        %v758 = vsub.s32 1, %v757
        %v759 = vrot.slane %v750, %v758
        %v762 = vmul.f32 %v747, %v755
        %v763 = vmul.f32 %v748, %v759
        %764 = vrot.lane.b32.xlu0 %v592, 111
        %v765 = vpop.permute.xlu0 %764
        %766 = vrot.lane.b32.xlu0 %v593, 111
        %v767 = vpop.permute.xlu0 %766
        %vm768 = vcmp.lt.s32.totalorder %v599, 111
        %v769 = vsel %vm768, %v765, %v767
        %v770 = vsel %vm768, %v767, %v765
        %s771 = scalar_lea.vmem %s5, 16
        %v772 = vld [vmem:[%s771] sm:$0x3]
        %v774 = vlaneseq
        %v775 = vshrl.u32 %v774, 7
        %v776 = vsub.s32 0, %v775
        %v777 = vrot.slane %v772, %v776
        %v778 = vlaneseq
        %v779 = vshrl.u32 %v778, 7
        %v780 = vsub.s32 1, %v779
        %v781 = vrot.slane %v772, %v780
        %v784 = vmul.f32 %v769, %v777
        %v785 = vmul.f32 %v770, %v781
        %v786 = vld [vmem:[%s4] sm:$0xf]
        %788 = vset.pattern.permute.xlu0 0
        %789 = vperm.xlu0 %788, %v786
        %v790 = vpop.permute.xlu0 %789
        %v792 = vlaneseq
        %v793 = vshrl.u32 %v792, 7
        %v794 = vsub.s32 0, %v793
        %v795 = vrot.slane %v615, %v794
        %v796 = vlaneseq
        %v797 = vshrl.u32 %v796, 7
        %v798 = vsub.s32 0, %v797
        %v799 = vrot.slane %v616, %v798
        %v800 = vmul.f32 %v790, %v795
        %v801 = vmul.f32 %v790, %v799
        %802 = vset.pattern.permute.xlu0 1
        %803 = vperm.xlu0 %802, %v786
        %v804 = vpop.permute.xlu0 %803
        %v806 = vlaneseq
        %v807 = vshrl.u32 %v806, 7
        %v808 = vsub.s32 1, %v807
        %v809 = vrot.slane %v615, %v808
        %v810 = vlaneseq
        %v811 = vshrl.u32 %v810, 7
        %v812 = vsub.s32 1, %v811
        %v813 = vrot.slane %v616, %v812
        %v814 = vmul.f32 %v804, %v809
        %v815 = vmul.f32 %v804, %v813
        %v816 = vadd.f32 %v800, %v814
        %v817 = vadd.f32 %v801, %v815
        %818 = vset.pattern.permute.xlu0 2
        %819 = vperm.xlu0 %818, %v786
        %v820 = vpop.permute.xlu0 %819
        %v822 = vlaneseq
        %v823 = vshrl.u32 %v822, 7
        %v824 = vsub.s32 2, %v823
        %v825 = vrot.slane %v615, %v824
        %v826 = vlaneseq
        %v827 = vshrl.u32 %v826, 7
        %v828 = vsub.s32 2, %v827
        %v829 = vrot.slane %v616, %v828
        %v830 = vmul.f32 %v820, %v825
        %v831 = vmul.f32 %v820, %v829
        %v832 = vadd.f32 %v816, %v830
        %v833 = vadd.f32 %v817, %v831
        %834 = vset.pattern.permute.xlu0 3
        %835 = vperm.xlu0 %834, %v786
        %v836 = vpop.permute.xlu0 %835
        %v838 = vlaneseq
        %v839 = vshrl.u32 %v838, 7
        %v840 = vsub.s32 3, %v839
        %v841 = vrot.slane %v615, %v840
        %v842 = vlaneseq
        %v843 = vshrl.u32 %v842, 7
        %v844 = vsub.s32 3, %v843
        %v845 = vrot.slane %v616, %v844
        %v846 = vmul.f32 %v836, %v841
        %v847 = vmul.f32 %v836, %v845
        %v848 = vadd.f32 %v832, %v846
        %v849 = vadd.f32 %v833, %v847
        %850 = vset.pattern.permute.xlu0 4
        %851 = vperm.xlu0 %850, %v786
        %v852 = vpop.permute.xlu0 %851
        %v854 = vlaneseq
        %v855 = vshrl.u32 %v854, 7
        %v856 = vsub.s32 0, %v855
        %v857 = vrot.slane %v637, %v856
        %v858 = vlaneseq
        %v859 = vshrl.u32 %v858, 7
        %v860 = vsub.s32 0, %v859
        %v861 = vrot.slane %v638, %v860
        %v862 = vmul.f32 %v852, %v857
        %v863 = vmul.f32 %v852, %v861
        %v864 = vadd.f32 %v848, %v862
        %v865 = vadd.f32 %v849, %v863
        %866 = vset.pattern.permute.xlu0 5
        %867 = vperm.xlu0 %866, %v786
        %v868 = vpop.permute.xlu0 %867
        %v870 = vlaneseq
        %v871 = vshrl.u32 %v870, 7
        %v872 = vsub.s32 1, %v871
        %v873 = vrot.slane %v637, %v872
        %v874 = vlaneseq
        %v875 = vshrl.u32 %v874, 7
        %v876 = vsub.s32 1, %v875
        %v877 = vrot.slane %v638, %v876
        %v878 = vmul.f32 %v868, %v873
        %v879 = vmul.f32 %v868, %v877
        %v880 = vadd.f32 %v864, %v878
        %v881 = vadd.f32 %v865, %v879
        %882 = vset.pattern.permute.xlu0 6
        %883 = vperm.xlu0 %882, %v786
        %v884 = vpop.permute.xlu0 %883
        %v886 = vlaneseq
        %v887 = vshrl.u32 %v886, 7
        %v888 = vsub.s32 2, %v887
        %v889 = vrot.slane %v637, %v888
        %v890 = vlaneseq
        %v891 = vshrl.u32 %v890, 7
        %v892 = vsub.s32 2, %v891
        %v893 = vrot.slane %v638, %v892
        %v894 = vmul.f32 %v884, %v889
        %v895 = vmul.f32 %v884, %v893
        %v896 = vadd.f32 %v880, %v894
        %v897 = vadd.f32 %v881, %v895
        %898 = vset.pattern.permute.xlu0 7
        %899 = vperm.xlu0 %898, %v786
        %v900 = vpop.permute.xlu0 %899
        %v902 = vlaneseq
        %v903 = vshrl.u32 %v902, 7
        %v904 = vsub.s32 3, %v903
        %v905 = vrot.slane %v637, %v904
        %v906 = vlaneseq
        %v907 = vshrl.u32 %v906, 7
        %v908 = vsub.s32 3, %v907
        %v909 = vrot.slane %v638, %v908
        %v910 = vmul.f32 %v900, %v905
        %v911 = vmul.f32 %v900, %v909
        %v912 = vadd.f32 %v896, %v910
        %v913 = vadd.f32 %v897, %v911
        %914 = vset.pattern.permute.xlu0 8
        %915 = vperm.xlu0 %914, %v786
        %v916 = vpop.permute.xlu0 %915
        %v918 = vlaneseq
        %v919 = vshrl.u32 %v918, 7
        %v920 = vsub.s32 0, %v919
        %v921 = vrot.slane %v659, %v920
        %v922 = vlaneseq
        %v923 = vshrl.u32 %v922, 7
        %v924 = vsub.s32 0, %v923
        %v925 = vrot.slane %v660, %v924
        %v926 = vmul.f32 %v916, %v921
        %v927 = vmul.f32 %v916, %v925
        %v928 = vadd.f32 %v912, %v926
        %v929 = vadd.f32 %v913, %v927
        %930 = vset.pattern.permute.xlu0 9
        %931 = vperm.xlu0 %930, %v786
        %v932 = vpop.permute.xlu0 %931
        %v934 = vlaneseq
        %v935 = vshrl.u32 %v934, 7
        %v936 = vsub.s32 1, %v935
        %v937 = vrot.slane %v659, %v936
        %v938 = vlaneseq
        %v939 = vshrl.u32 %v938, 7
        %v940 = vsub.s32 1, %v939
        %v941 = vrot.slane %v660, %v940
        %v942 = vmul.f32 %v932, %v937
        %v943 = vmul.f32 %v932, %v941
        %v944 = vadd.f32 %v928, %v942
        %v945 = vadd.f32 %v929, %v943
        %946 = vset.pattern.permute.xlu0 10
        %947 = vperm.xlu0 %946, %v786
        %v948 = vpop.permute.xlu0 %947
        %v950 = vlaneseq
        %v951 = vshrl.u32 %v950, 7
        %v952 = vsub.s32 2, %v951
        %v953 = vrot.slane %v659, %v952
        %v954 = vlaneseq
        %v955 = vshrl.u32 %v954, 7
        %v956 = vsub.s32 2, %v955
        %v957 = vrot.slane %v660, %v956
        %v958 = vmul.f32 %v948, %v953
        %v959 = vmul.f32 %v948, %v957
        %v960 = vadd.f32 %v944, %v958
        %v961 = vadd.f32 %v945, %v959
        %962 = vset.pattern.permute.xlu0 11
        %963 = vperm.xlu0 %962, %v786
        %v964 = vpop.permute.xlu0 %963
        %v966 = vlaneseq
        %v967 = vshrl.u32 %v966, 7
        %v968 = vsub.s32 3, %v967
        %v969 = vrot.slane %v659, %v968
        %v970 = vlaneseq
        %v971 = vshrl.u32 %v970, 7
        %v972 = vsub.s32 3, %v971
        %v973 = vrot.slane %v660, %v972
        %v974 = vmul.f32 %v964, %v969
        %v975 = vmul.f32 %v964, %v973
        %v976 = vadd.f32 %v960, %v974
        %v977 = vadd.f32 %v961, %v975
        %978 = vset.pattern.permute.xlu0 12
        %979 = vperm.xlu0 %978, %v786
        %v980 = vpop.permute.xlu0 %979
        %v982 = vlaneseq
        %v983 = vshrl.u32 %v982, 7
        %v984 = vsub.s32 0, %v983
        %v985 = vrot.slane %v681, %v984
        %v986 = vlaneseq
        %v987 = vshrl.u32 %v986, 7
        %v988 = vsub.s32 0, %v987
        %v989 = vrot.slane %v682, %v988
        %v990 = vmul.f32 %v980, %v985
        %v991 = vmul.f32 %v980, %v989
        %v992 = vadd.f32 %v976, %v990
        %v993 = vadd.f32 %v977, %v991
        %994 = vset.pattern.permute.xlu0 13
        %995 = vperm.xlu0 %994, %v786
        %v996 = vpop.permute.xlu0 %995
        %v998 = vlaneseq
        %v999 = vshrl.u32 %v998, 7
        %v1000 = vsub.s32 1, %v999
        %v1001 = vrot.slane %v681, %v1000
        %v1002 = vlaneseq
        %v1003 = vshrl.u32 %v1002, 7
        %v1004 = vsub.s32 1, %v1003
        %v1005 = vrot.slane %v682, %v1004
        %v1006 = vmul.f32 %v996, %v1001
        %v1007 = vmul.f32 %v996, %v1005
        %v1008 = vadd.f32 %v992, %v1006
        %v1009 = vadd.f32 %v993, %v1007
        %1010 = vset.pattern.permute.xlu0 14
        %1011 = vperm.xlu0 %1010, %v786
        %v1012 = vpop.permute.xlu0 %1011
        %v1014 = vlaneseq
        %v1015 = vshrl.u32 %v1014, 7
        %v1016 = vsub.s32 2, %v1015
        %v1017 = vrot.slane %v681, %v1016
        %v1018 = vlaneseq
        %v1019 = vshrl.u32 %v1018, 7
        %v1020 = vsub.s32 2, %v1019
        %v1021 = vrot.slane %v682, %v1020
        %v1022 = vmul.f32 %v1012, %v1017
        %v1023 = vmul.f32 %v1012, %v1021
        %v1024 = vadd.f32 %v1008, %v1022
        %v1025 = vadd.f32 %v1009, %v1023
        %1026 = vset.pattern.permute.xlu0 15
        %1027 = vperm.xlu0 %1026, %v786
        %v1028 = vpop.permute.xlu0 %1027
        %v1030 = vlaneseq
        %v1031 = vshrl.u32 %v1030, 7
        %v1032 = vsub.s32 3, %v1031
        %v1033 = vrot.slane %v681, %v1032
        %v1034 = vlaneseq
        %v1035 = vshrl.u32 %v1034, 7
        %v1036 = vsub.s32 3, %v1035
        %v1037 = vrot.slane %v682, %v1036
        %v1038 = vmul.f32 %v1028, %v1033
        %v1039 = vmul.f32 %v1028, %v1037
        %v1040 = vadd.f32 %v1024, %v1038
        %v1041 = vadd.f32 %v1025, %v1039
        %1042 = vset.pattern.permute.xlu0 16
        %1043 = vperm.xlu0 %1042, %v786
        %v1044 = vpop.permute.xlu0 %1043
        %v1046 = vlaneseq
        %v1047 = vshrl.u32 %v1046, 7
        %v1048 = vsub.s32 0, %v1047
        %v1049 = vrot.slane %v696, %v1048
        %v1050 = vlaneseq
        %v1051 = vshrl.u32 %v1050, 7
        %v1052 = vsub.s32 0, %v1051
        %v1053 = vrot.slane %v697, %v1052
        %v1054 = vmul.f32 %v1044, %v1049
        %v1055 = vmul.f32 %v1044, %v1053
        %v1056 = vadd.f32 %v1040, %v1054
        %v1057 = vadd.f32 %v1041, %v1055
        %1058 = vset.pattern.permute.xlu0 17
        %1059 = vperm.xlu0 %1058, %v786
        %v1060 = vpop.permute.xlu0 %1059
        %v1062 = vlaneseq
        %v1063 = vshrl.u32 %v1062, 7
        %v1064 = vsub.s32 1, %v1063
        %v1065 = vrot.slane %v696, %v1064
        %v1066 = vlaneseq
        %v1067 = vshrl.u32 %v1066, 7
        %v1068 = vsub.s32 1, %v1067
        %v1069 = vrot.slane %v697, %v1068
        %v1070 = vmul.f32 %v1060, %v1065
        %v1071 = vmul.f32 %v1060, %v1069
        %v1072 = vadd.f32 %v1056, %v1070
        %v1073 = vadd.f32 %v1057, %v1071
        %1074 = vset.pattern.permute.xlu0 18
        %1075 = vperm.xlu0 %1074, %v786
        %v1076 = vpop.permute.xlu0 %1075
        %v1078 = vlaneseq
        %v1079 = vshrl.u32 %v1078, 7
        %v1080 = vsub.s32 2, %v1079
        %v1081 = vrot.slane %v696, %v1080
        %v1082 = vlaneseq
        %v1083 = vshrl.u32 %v1082, 7
        %v1084 = vsub.s32 2, %v1083
        %v1085 = vrot.slane %v697, %v1084
        %v1086 = vmul.f32 %v1076, %v1081
        %v1087 = vmul.f32 %v1076, %v1085
        %v1088 = vadd.f32 %v1072, %v1086
        %v1089 = vadd.f32 %v1073, %v1087
        %1090 = vset.pattern.permute.xlu0 19
        %1091 = vperm.xlu0 %1090, %v786
        %v1092 = vpop.permute.xlu0 %1091
        %v1094 = vlaneseq
        %v1095 = vshrl.u32 %v1094, 7
        %v1096 = vsub.s32 3, %v1095
        %v1097 = vrot.slane %v696, %v1096
        %v1098 = vlaneseq
        %v1099 = vshrl.u32 %v1098, 7
        %v1100 = vsub.s32 3, %v1099
        %v1101 = vrot.slane %v697, %v1100
        %v1102 = vmul.f32 %v1092, %v1097
        %v1103 = vmul.f32 %v1092, %v1101
        %v1104 = vadd.f32 %v1088, %v1102
        %v1105 = vadd.f32 %v1089, %v1103
        %1106 = vset.pattern.permute.xlu0 20
        %1107 = vperm.xlu0 %1106, %v786
        %v1108 = vpop.permute.xlu0 %1107
        %v1110 = vlaneseq
        %v1111 = vshrl.u32 %v1110, 7
        %v1112 = vsub.s32 0, %v1111
        %v1113 = vrot.slane %v718, %v1112
        %v1114 = vlaneseq
        %v1115 = vshrl.u32 %v1114, 7
        %v1116 = vsub.s32 0, %v1115
        %v1117 = vrot.slane %v719, %v1116
        %v1118 = vmul.f32 %v1108, %v1113
        %v1119 = vmul.f32 %v1108, %v1117
        %v1120 = vadd.f32 %v1104, %v1118
        %v1121 = vadd.f32 %v1105, %v1119
        %1122 = vset.pattern.permute.xlu0 21
        %1123 = vperm.xlu0 %1122, %v786
        %v1124 = vpop.permute.xlu0 %1123
        %v1126 = vlaneseq
        %v1127 = vshrl.u32 %v1126, 7
        %v1128 = vsub.s32 1, %v1127
        %v1129 = vrot.slane %v718, %v1128
        %v1130 = vlaneseq
        %v1131 = vshrl.u32 %v1130, 7
        %v1132 = vsub.s32 1, %v1131
        %v1133 = vrot.slane %v719, %v1132
        %v1134 = vmul.f32 %v1124, %v1129
        %v1135 = vmul.f32 %v1124, %v1133
        %v1136 = vadd.f32 %v1120, %v1134
        %v1137 = vadd.f32 %v1121, %v1135
        %1138 = vset.pattern.permute.xlu0 22
        %1139 = vperm.xlu0 %1138, %v786
        %v1140 = vpop.permute.xlu0 %1139
        %v1142 = vlaneseq
        %v1143 = vshrl.u32 %v1142, 7
        %v1144 = vsub.s32 2, %v1143
        %v1145 = vrot.slane %v718, %v1144
        %v1146 = vlaneseq
        %v1147 = vshrl.u32 %v1146, 7
        %v1148 = vsub.s32 2, %v1147
        %v1149 = vrot.slane %v719, %v1148
        %v1150 = vmul.f32 %v1140, %v1145
        %v1151 = vmul.f32 %v1140, %v1149
        %v1152 = vadd.f32 %v1136, %v1150
        %v1153 = vadd.f32 %v1137, %v1151
        %1154 = vset.pattern.permute.xlu0 23
        %1155 = vperm.xlu0 %1154, %v786
        %v1156 = vpop.permute.xlu0 %1155
        %v1158 = vlaneseq
        %v1159 = vshrl.u32 %v1158, 7
        %v1160 = vsub.s32 3, %v1159
        %v1161 = vrot.slane %v718, %v1160
        %v1162 = vlaneseq
        %v1163 = vshrl.u32 %v1162, 7
        %v1164 = vsub.s32 3, %v1163
        %v1165 = vrot.slane %v719, %v1164
        %v1166 = vmul.f32 %v1156, %v1161
        %v1167 = vmul.f32 %v1156, %v1165
        %v1168 = vadd.f32 %v1152, %v1166
        %v1169 = vadd.f32 %v1153, %v1167
        %1170 = vset.pattern.permute.xlu0 24
        %1171 = vperm.xlu0 %1170, %v786
        %v1172 = vpop.permute.xlu0 %1171
        %v1174 = vlaneseq
        %v1175 = vshrl.u32 %v1174, 7
        %v1176 = vsub.s32 0, %v1175
        %v1177 = vrot.slane %v740, %v1176
        %v1178 = vlaneseq
        %v1179 = vshrl.u32 %v1178, 7
        %v1180 = vsub.s32 0, %v1179
        %v1181 = vrot.slane %v741, %v1180
        %v1182 = vmul.f32 %v1172, %v1177
        %v1183 = vmul.f32 %v1172, %v1181
        %v1184 = vadd.f32 %v1168, %v1182
        %v1185 = vadd.f32 %v1169, %v1183
        %1186 = vset.pattern.permute.xlu0 25
        %1187 = vperm.xlu0 %1186, %v786
        %v1188 = vpop.permute.xlu0 %1187
        %v1190 = vlaneseq
        %v1191 = vshrl.u32 %v1190, 7
        %v1192 = vsub.s32 1, %v1191
        %v1193 = vrot.slane %v740, %v1192
        %v1194 = vlaneseq
        %v1195 = vshrl.u32 %v1194, 7
        %v1196 = vsub.s32 1, %v1195
        %v1197 = vrot.slane %v741, %v1196
        %v1198 = vmul.f32 %v1188, %v1193
        %v1199 = vmul.f32 %v1188, %v1197
        %v1200 = vadd.f32 %v1184, %v1198
        %v1201 = vadd.f32 %v1185, %v1199
        %1202 = vset.pattern.permute.xlu0 26
        %1203 = vperm.xlu0 %1202, %v786
        %v1204 = vpop.permute.xlu0 %1203
        %v1206 = vlaneseq
        %v1207 = vshrl.u32 %v1206, 7
        %v1208 = vsub.s32 2, %v1207
        %v1209 = vrot.slane %v740, %v1208
        %v1210 = vlaneseq
        %v1211 = vshrl.u32 %v1210, 7
        %v1212 = vsub.s32 2, %v1211
        %v1213 = vrot.slane %v741, %v1212
        %v1214 = vmul.f32 %v1204, %v1209
        %v1215 = vmul.f32 %v1204, %v1213
        %v1216 = vadd.f32 %v1200, %v1214
        %v1217 = vadd.f32 %v1201, %v1215
        %1218 = vset.pattern.permute.xlu0 27
        %1219 = vperm.xlu0 %1218, %v786
        %v1220 = vpop.permute.xlu0 %1219
        %v1222 = vlaneseq
        %v1223 = vshrl.u32 %v1222, 7
        %v1224 = vsub.s32 3, %v1223
        %v1225 = vrot.slane %v740, %v1224
        %v1226 = vlaneseq
        %v1227 = vshrl.u32 %v1226, 7
        %v1228 = vsub.s32 3, %v1227
        %v1229 = vrot.slane %v741, %v1228
        %v1230 = vmul.f32 %v1220, %v1225
        %v1231 = vmul.f32 %v1220, %v1229
        %v1232 = vadd.f32 %v1216, %v1230
        %v1233 = vadd.f32 %v1217, %v1231
        %1234 = vset.pattern.permute.xlu0 28
        %1235 = vperm.xlu0 %1234, %v786
        %v1236 = vpop.permute.xlu0 %1235
        %v1238 = vlaneseq
        %v1239 = vshrl.u32 %v1238, 7
        %v1240 = vsub.s32 0, %v1239
        %v1241 = vrot.slane %v762, %v1240
        %v1242 = vlaneseq
        %v1243 = vshrl.u32 %v1242, 7
        %v1244 = vsub.s32 0, %v1243
        %v1245 = vrot.slane %v763, %v1244
        %v1246 = vmul.f32 %v1236, %v1241
        %v1247 = vmul.f32 %v1236, %v1245
        %v1248 = vadd.f32 %v1232, %v1246
        %v1249 = vadd.f32 %v1233, %v1247
        %1250 = vset.pattern.permute.xlu0 29
        %1251 = vperm.xlu0 %1250, %v786
        %v1252 = vpop.permute.xlu0 %1251
        %v1254 = vlaneseq
        %v1255 = vshrl.u32 %v1254, 7
        %v1256 = vsub.s32 1, %v1255
        %v1257 = vrot.slane %v762, %v1256
        %v1258 = vlaneseq
        %v1259 = vshrl.u32 %v1258, 7
        %v1260 = vsub.s32 1, %v1259
        %v1261 = vrot.slane %v763, %v1260
        %v1262 = vmul.f32 %v1252, %v1257
        %v1263 = vmul.f32 %v1252, %v1261
        %v1264 = vadd.f32 %v1248, %v1262
        %v1265 = vadd.f32 %v1249, %v1263
        %1266 = vset.pattern.permute.xlu0 30
        %1267 = vperm.xlu0 %1266, %v786
        %v1268 = vpop.permute.xlu0 %1267
        %v1270 = vlaneseq
        %v1271 = vshrl.u32 %v1270, 7
        %v1272 = vsub.s32 2, %v1271
        %v1273 = vrot.slane %v762, %v1272
        %v1274 = vlaneseq
        %v1275 = vshrl.u32 %v1274, 7
        %v1276 = vsub.s32 2, %v1275
        %v1277 = vrot.slane %v763, %v1276
        %v1278 = vmul.f32 %v1268, %v1273
        %v1279 = vmul.f32 %v1268, %v1277
        %v1280 = vadd.f32 %v1264, %v1278
        %v1281 = vadd.f32 %v1265, %v1279
        %1282 = vset.pattern.permute.xlu0 31
        %1283 = vperm.xlu0 %1282, %v786
        %v1284 = vpop.permute.xlu0 %1283
        %v1286 = vlaneseq
        %v1287 = vshrl.u32 %v1286, 7
        %v1288 = vsub.s32 3, %v1287
        %v1289 = vrot.slane %v762, %v1288
        %v1290 = vlaneseq
        %v1291 = vshrl.u32 %v1290, 7
        %v1292 = vsub.s32 3, %v1291
        %v1293 = vrot.slane %v763, %v1292
        %v1294 = vmul.f32 %v1284, %v1289
        %v1295 = vmul.f32 %v1284, %v1293
        %v1296 = vadd.f32 %v1280, %v1294
        %v1297 = vadd.f32 %v1281, %v1295
        %1298 = vset.pattern.permute.xlu0 32
        %1299 = vperm.xlu0 %1298, %v786
        %v1300 = vpop.permute.xlu0 %1299
        %v1302 = vlaneseq
        %v1303 = vshrl.u32 %v1302, 7
        %v1304 = vsub.s32 0, %v1303
        %v1305 = vrot.slane %v784, %v1304
        %v1306 = vlaneseq
        %v1307 = vshrl.u32 %v1306, 7
        %v1308 = vsub.s32 0, %v1307
        %v1309 = vrot.slane %v785, %v1308
        %v1310 = vmul.f32 %v1300, %v1305
        %v1311 = vmul.f32 %v1300, %v1309
        %v1312 = vadd.f32 %v1296, %v1310
        %v1313 = vadd.f32 %v1297, %v1311
        %1314 = vset.pattern.permute.xlu0 33
        %1315 = vperm.xlu0 %1314, %v786
        %v1316 = vpop.permute.xlu0 %1315
        %v1318 = vlaneseq
        %v1319 = vshrl.u32 %v1318, 7
        %v1320 = vsub.s32 1, %v1319
        %v1321 = vrot.slane %v784, %v1320
        %v1322 = vlaneseq
        %v1323 = vshrl.u32 %v1322, 7
        %v1324 = vsub.s32 1, %v1323
        %v1325 = vrot.slane %v785, %v1324
        %v1326 = vmul.f32 %v1316, %v1321
        %v1327 = vmul.f32 %v1316, %v1325
        %v1328 = vadd.f32 %v1312, %v1326
        %v1329 = vadd.f32 %v1313, %v1327
        %1330 = vset.pattern.permute.xlu0 34
        %1331 = vperm.xlu0 %1330, %v786
        %v1332 = vpop.permute.xlu0 %1331
        %v1334 = vlaneseq
        %v1335 = vshrl.u32 %v1334, 7
        %v1336 = vsub.s32 2, %v1335
        %v1337 = vrot.slane %v784, %v1336
        %v1338 = vlaneseq
        %v1339 = vshrl.u32 %v1338, 7
        %v1340 = vsub.s32 2, %v1339
        %v1341 = vrot.slane %v785, %v1340
        %v1342 = vmul.f32 %v1332, %v1337
        %v1343 = vmul.f32 %v1332, %v1341
        %v1344 = vadd.f32 %v1328, %v1342
        %v1345 = vadd.f32 %v1329, %v1343
        %1346 = vset.pattern.permute.xlu0 35
        %1347 = vperm.xlu0 %1346, %v786
        %v1348 = vpop.permute.xlu0 %1347
        %v1350 = vlaneseq
        %v1351 = vshrl.u32 %v1350, 7
        %v1352 = vsub.s32 3, %v1351
        %v1353 = vrot.slane %v784, %v1352
        %v1354 = vlaneseq
        %v1355 = vshrl.u32 %v1354, 7
        %v1356 = vsub.s32 3, %v1355
        %v1357 = vrot.slane %v785, %v1356
        %v1358 = vmul.f32 %v1348, %v1353
        %v1359 = vmul.f32 %v1348, %v1357
        %v1360 = vadd.f32 %v1344, %v1358
        %v1361 = vadd.f32 %v1345, %v1359
        %s1362 = scalar_lea.vmem %s3, 8
        %v1363 = vld [vmem:[%s1362] sm:$0xf]
        %1365 = vset.pattern.permute.xlu0 0
        %1366 = vperm.xlu0 %1365, %v1363
        %v1367 = vpop.permute.xlu0 %1366
        %v1369 = vmul.f32 %v1360, %v1367
        %v1370 = vmul.f32 %v1361, %v1367
        %s1371 = scalar_lea.vmem %s3, 12
        %v1372 = vld [vmem:[%s1371] sm:$0xf]
        %1374 = vset.pattern.permute.xlu0 0
        %1375 = vperm.xlu0 %1374, %v1372
        %v1376 = vpop.permute.xlu0 %1375
        %v1378 = vadd.f32 %v1369, %v1376
        %v1379 = vadd.f32 %v1370, %v1376
        %v1380 = vmax.f32 %v1378, 0.0
        %v1381 = vmax.f32 %v1379, 0.0
        %v1382 = vld [vmem:[%s6] sm:$0xff]
        %1384 = vset.pattern.permute.xlu0 0
        %1385 = vperm.xlu0 %1384, %v1382
        %v1386 = vpop.permute.xlu0 %1385
        %v1388 = vlaneseq
        %v1389 = vshrl.u32 %v1388, 7
        %v1390 = vsub.s32 0, %v1389
        %v1391 = vrot.slane %v1380, %v1390
        %v1392 = vlaneseq
        %v1393 = vshrl.u32 %v1392, 7
        %v1394 = vsub.s32 0, %v1393
        %v1395 = vrot.slane %v1381, %v1394
        %v1396 = vmul.f32 %v1386, %v1391
        %v1397 = vmul.f32 %v1386, %v1395
        %1398 = vset.pattern.permute.xlu0 1
        %1399 = vperm.xlu0 %1398, %v1382
        %v1400 = vpop.permute.xlu0 %1399
        %v1402 = vlaneseq
        %v1403 = vshrl.u32 %v1402, 7
        %v1404 = vsub.s32 1, %v1403
        %v1405 = vrot.slane %v1380, %v1404
        %v1406 = vlaneseq
        %v1407 = vshrl.u32 %v1406, 7
        %v1408 = vsub.s32 1, %v1407
        %v1409 = vrot.slane %v1381, %v1408
        %v1410 = vmul.f32 %v1400, %v1405
        %v1411 = vmul.f32 %v1400, %v1409
        %v1412 = vadd.f32 %v1396, %v1410
        %v1413 = vadd.f32 %v1397, %v1411
        %1414 = vset.pattern.permute.xlu0 2
        %1415 = vperm.xlu0 %1414, %v1382
        %v1416 = vpop.permute.xlu0 %1415
        %v1418 = vlaneseq
        %v1419 = vshrl.u32 %v1418, 7
        %v1420 = vsub.s32 2, %v1419
        %v1421 = vrot.slane %v1380, %v1420
        %v1422 = vlaneseq
        %v1423 = vshrl.u32 %v1422, 7
        %v1424 = vsub.s32 2, %v1423
        %v1425 = vrot.slane %v1381, %v1424
        %v1426 = vmul.f32 %v1416, %v1421
        %v1427 = vmul.f32 %v1416, %v1425
        %v1428 = vadd.f32 %v1412, %v1426
        %v1429 = vadd.f32 %v1413, %v1427
        %1430 = vset.pattern.permute.xlu0 3
        %1431 = vperm.xlu0 %1430, %v1382
        %v1432 = vpop.permute.xlu0 %1431
        %v1434 = vlaneseq
        %v1435 = vshrl.u32 %v1434, 7
        %v1436 = vsub.s32 3, %v1435
        %v1437 = vrot.slane %v1380, %v1436
        %v1438 = vlaneseq
        %v1439 = vshrl.u32 %v1438, 7
        %v1440 = vsub.s32 3, %v1439
        %v1441 = vrot.slane %v1381, %v1440
        %v1442 = vmul.f32 %v1432, %v1437
        %v1443 = vmul.f32 %v1432, %v1441
        %v1444 = vadd.f32 %v1428, %v1442
        %v1445 = vadd.f32 %v1429, %v1443
        %v1446 = vld [vmem:[%s7] sm:$0xff]
        %1448 = vset.pattern.permute.xlu0 0
        %1449 = vperm.xlu0 %1448, %v1446
        %v1450 = vpop.permute.xlu0 %1449
        %v1452 = vadd.f32 %v1444, %v1450
        %v1453 = vadd.f32 %v1445, %v1450
        %v1454 = vadd.f32 %v1452, %v438
        %v1455 = vadd.f32 %v1453, %v439
        %1456 = vst [vmem:[%s326] sm:$0xff] %v1454
        %1457 = vst [vmem:[%s326 + $0x8] sm:$0xff] %v1455
        %s1458 = sand.u32 %s225, 1
        %s1459 = scalar_lea.sflag [#allocation3], %s1458
        %s1460 = sand.u32 %s225, 1
        %s1461 = smul.addr %s1460, 16
        %s1462 = scalar_lea.vmem [#allocation2], %s1461
        // Predicated region
        $region57: #{tpu_custom_call.1} parent=55 // pred_check
          %p1463 = pneg %p235
        $region58: #{tpu_custom_call.1} parent=55 // pred_check_branch
          %1465 = sbr.rel (%p1463) target = $region60
        $region59: #{tpu_custom_call.1} parent=55 // pred_region
          %s1466 = smul.u32 2, %s23
          %s1468 = ssub.s32 256, 256
          %1469 = vsyncadd %s1459, %s1468
          %s1470 = smul.addr %s1466, 128
          %s1471 = scalar_lea.hbm %s9, %s1470
          %s1473 = sshll.u32 %s1462, 4
          %s1474 = int_to_ptr.vmem [resolvable:$true] %s1473
          %1476 = dma.vmem_to_hbm [thread:$0]  %s1474, 256, %s1471, %s1459
        $region60: #{tpu_custom_call.1} parent=55 // pred_fallthru
          _
      $region56: #{tpu_custom_call.1} parent=5 // pred_fallthru
        _
      %p1477 = scmp.le.s32.totalorder 2, %s18
      // Predicated region
      $region61: #{tpu_custom_call.1} parent=5 // pred_check
        %p1478 = pneg %p1477
      $region62: #{tpu_custom_call.1} parent=5 // pred_check_branch
        %1480 = sbr.rel (%p1478) target = $region64
      $region63: #{tpu_custom_call.1} parent=5 // pred_region
        %s1481 = ssub.s32 %s18, 2
        // Predicated region
        $region65: #{tpu_custom_call.1} parent=63 // pred_check
          %p1482 = pneg %p241
        $region66: #{tpu_custom_call.1} parent=63 // pred_check_branch
          %1484 = sbr.rel (%p1482) target = $region68
        $region67: #{tpu_custom_call.1} parent=63 // pred_region
          %s1485 = sand.u32 %s226, 1
          %s1486 = scalar_lea.sflag [#allocation3], %s1485
          %s1487 = sand.u32 %s226, 1
          %s1488 = smul.addr %s1487, 16
          %s1489 = scalar_lea.vmem [#allocation2], %s1488
          %1490 = dma.done %s1486, 256
        $region68: #{tpu_custom_call.1} parent=63 // pred_fallthru
          _
      $region64: #{tpu_custom_call.1} parent=5 // pred_fallthru
        _
    $region6: #{tpu_custom_call.1} parent=1 // loop_footer
      %s22 = sadd.s32 1, %s18
    $region7: #{tpu_custom_call.1} parent=1 // loop_footer_branch
      %17 = sbr.rel target = $region3
    $region8: #{tpu_custom_call.1} parent=1 // loop_exit
      _
    %1491 = vsyncpa [#allocation3], 1
    %s1492 = scalar_lea.sflag [#allocation3], 1
    %1493 = vsyncpa %s1492, 1

</llo_original>
